<compile_context>
chip_gen: v7x
topology: tpu7x:2x2x1
jax: 0.10.0
libtpu: 0.0.40
codegen_flags: <defaults>
</compile_context>

<pallas_src>
import functools

import jax
import jax.numpy as jnp
import numpy as np
from jax.experimental import pallas as pl
from jax.experimental.pallas import tpu as pltpu

NEG_SLOPE = 0.01                  # nn.LeakyReLU default
KLD_NORM = 0.5 / (128.0 * 3.0)    # module hard-codes /(128*3) regardless of B


def _lrelu(v):
    # max-form LeakyReLU: 2 VPU ops instead of 3 on the saturating VALU slot.
    return jnp.maximum(v, NEG_SLOPE * v)


def _round_up(n, m):
    return (n + m - 1) // m * m


# ---------------------------------------------------------------------------
# Kernel: one batch tile (TB lanes) per grid step.
# ---------------------------------------------------------------------------
def _vae_kernel(n_valid,                       # static: true batch size (mask)
                x_ref, eps_ref,                # (3, TB), (8, TB)
                w_in_ref, b_in_ref,            # (8, 3), (8, 1)
                wct_ref, bct_ref,              # (48, 8), (48, 1)  Toeplitz conv
                wout_ref, bout_ref,            # (16, 24), (16, 1)
                mdec_ref, bdec_ref,            # (24, 8), (1, 1)   ConvTranspose1d
                w4_ref, b4_ref,                # (1, 24), (1, 1)
                xhat_ref, kld_ref):            # (1, TB), (1, 1, 1)
    tb = x_ref.shape[1]

    # ---- encode -----------------------------------------------------------
    # Linear(3, 8): K=3 degenerate matmul, but the MXU slot is idle -> jnp.dot.
    h0 = _lrelu(jnp.dot(w_in_ref[...], x_ref[...],
                        preferred_element_type=jnp.float32)
                + b_in_ref[...])               # (8, TB)

    # Conv1d(1, 8, k=3) over the 8-wide feature axis: all 6 output positions
    # fused into ONE banded/Toeplitz matmul.  Rows [0:24) = even positions
    # (0,2,4), rows [24:48) = odd positions (1,3,5); within a half the row
    # index is 8*p + oc.
    conv = (jnp.dot(wct_ref[...], h0, preferred_element_type=jnp.float32)
            + bct_ref[...])                    # (48, TB)

    # MaxPool1d(k=2, s=2) + LeakyReLU: one maximum of the two sublane halves.
    pooled = _lrelu(jnp.maximum(conv[:24, :], conv[24:, :]))       # (24, TB)

    # Linear(24, 16) as one matmul (weight pre-permuted to the pooled layout).
    h = (jnp.dot(wout_ref[...], pooled, preferred_element_type=jnp.float32)
         + bout_ref[...])                      # (16, TB)
    # ELU.  exp overflow in the unselected branch is discarded by the select
    # (inf, not NaN), so no clamp is needed.
    h = jnp.where(h > 0, h, jnp.exp(h) - 1.0)

    mu = h[:8, :]
    logvar = h[8:16, :]

    # ---- reparameterize (eps streamed in; q = mu + logvar*eps as in module) -
    q = mu + logvar * eps_ref[...]             # (8, TB)

    # ---- decode -------------------------------------------------------------
    # ConvTranspose1d(1,1,3,stride=3,padding=1,output_padding=1) as a (24,8)
    # scatter matmul (row 23 is zero padding -> three clean sublane groups).
    y = jnp.maximum(
        jnp.dot(mdec_ref[...], q, preferred_element_type=jnp.float32)
        + bdec_ref[...], 0.0)                  # (24, TB)

    # Linear(23, 1): (1,24)@(24,TB) on the MXU (w4[0,23] == 0 so the padded
    # row contributes nothing); lane-dense (1, TB) output row.
    xhat_ref[...] = (jnp.dot(w4_ref[...], y, preferred_element_type=jnp.float32)
                     + b4_ref[...])            # (1, TB)

    # ---- KL partial sum for this batch tile (mask padded lanes) -------------
    lane = jax.lax.broadcasted_iota(jnp.int32, (1, tb), 1)
    valid = (pl.program_id(0) * tb + lane) < n_valid
    lv2 = logvar * logvar
    elems = mu * mu + lv2 - jnp.log(1e-8 + lv2) - 1.0              # (8, TB)
    part = jnp.sum(jnp.where(valid, elems, 0.0), axis=1, keepdims=True)  # (8,1)
    part = jnp.sum(part, axis=0, keepdims=True)                    # (1, 1)
    kld_ref[...] = (KLD_NORM * part).reshape(1, 1, 1)


# ---------------------------------------------------------------------------
# Wrapper: 1-D "parallel" batch grid, lane-dense output slab, per-tile KL.
# ---------------------------------------------------------------------------
def vae_forward(xT, epsT, kernel_params, tile_b=4096):
    """xT: (3, B) f32, epsT: (8, B) f32 (batch already on the lane axis).

    Returns (x_hat (B, 1), kld scalar).  tile_b must be a multiple of 128;
    sweep 2048/4096/8192 per TPU generation (4096 default is safe on v5e).
    """
    assert tile_b % 128 == 0, "tile_b must be a multiple of 128"
    B = xT.shape[1]

    # 128-aligned batch tiles; guarantee >= 2 equal tiles whenever the batch
    # allows it (v7x two-TC split + cross-step DMA/compute overlap everywhere).
    B_128 = _round_up(B, 128)
    TB = int(min(tile_b, B_128))
    if B_128 >= 256 and B_128 <= TB:
        TB = _round_up(B_128 // 2, 128)
    B_pad = _round_up(B, TB)
    nt = B_pad // TB

    # Only remaining layout plumbing: pad the lane axis up to a tile multiple.
    xT = xT.astype(jnp.float32)
    epsT = epsT.astype(jnp.float32)
    if B_pad != B:
        xT = jnp.pad(xT, ((0, 0), (0, B_pad - B)))
        epsT = jnp.pad(epsT, ((0, 0), (0, B_pad - B)))

    stream = lambda i: (0, i)
    const = lambda i: (0, 0)

    # Weights stay as separate tiny resident inputs: they are fetched once
    # (constant index_map) and keep the kernel/lowering simple.
    in_specs = ([pl.BlockSpec((3, TB), stream),            # x (batch-tiled)
                 pl.BlockSpec((8, TB), stream)]            # eps (batch-tiled)
                + [pl.BlockSpec(p.shape, const)            # tiny weights, resident
                   for p in kernel_params])
    out_specs = (pl.BlockSpec((1, TB), stream),            # lane-dense x_hat row
                 pl.BlockSpec((1, 1, 1), lambda i: (i, 0, 0)))  # per-tile KL partial
    out_shape = (jax.ShapeDtypeStruct((1, B_pad), jnp.float32),
                 jax.ShapeDtypeStruct((nt, 1, 1), jnp.float32))

    xhat_row, kld_parts = pl.pallas_call(
        functools.partial(_vae_kernel, B),
        grid=(nt,),
        in_specs=in_specs,
        out_specs=out_specs,
        out_shape=out_shape,
        compiler_params=pltpu.CompilerParams(
            dimension_semantics=("parallel",)),
    )(xT, epsT, *kernel_params)

    x_hat = jnp.transpose(xhat_row[:, :B])                 # (B, 1)
    kld = jnp.sum(kld_parts)
    return x_hat, kld


# ---------------------------------------------------------------------------
# Parameter construction (deterministic, PyTorch-default-style uniform init)
# ---------------------------------------------------------------------------
def init_params(key):
    ks = jax.random.split(key, 10)

    def u(k, shape, fan_in):
        bound = 1.0 / jnp.sqrt(float(fan_in))
        return jax.random.uniform(k, shape, jnp.float32, -bound, bound)

    return {
        "w_in":    u(ks[0], (8, 3), 3),        # nn.Linear(3, 8)
        "b_in":    u(ks[1], (8,), 3),
        "w_conv":  u(ks[2], (8, 1, 3), 3),     # nn.Conv1d(1, 8, 3)
        "b_conv":  u(ks[3], (8,), 3),
        "w_out":   u(ks[4], (16, 24), 24),     # nn.Linear(24, 16)
        "b_out":   u(ks[5], (16,), 24),
        "w_dconv": u(ks[6], (1, 1, 3), 3),     # nn.ConvTranspose1d(1, 1, 3, ...)
        "b_dconv": u(ks[7], (1,), 3),
        "w_fc4":   u(ks[8], (1, 23), 23),      # nn.Linear(23, 1)
        "b_fc4":   u(ks[9], (1,), 23),
    }


def make_kernel_params(p):
    """Pre-build transposed-space, fused, 8-row-padded weights for the kernel."""
    # Linear(3, 8): used as W @ x^T, so PyTorch (out,in) layout is already right.
    w_in = p["w_in"]                                       # (8, 3)
    b_in = p["b_in"].reshape(8, 1)

    # Conv1d(1, 8, 3) -> (48, 8) Toeplitz matrix.  Row = half*24 + p*8 + oc,
    # where half 0 holds even positions (0,2,4) and half 1 odd positions (1,3,5).
    wc = np.asarray(p["w_conv"])[:, 0, :]                  # (8 oc, 3 k)
    bc = np.asarray(p["b_conv"])                           # (8,)
    w_toep = np.zeros((48, 8), np.float32)
    b_toep = np.zeros((48, 1), np.float32)
    for half in range(2):
        for pp in range(3):
            t = 2 * pp + half                              # conv position 0..5
            for oc in range(8):
                r = half * 24 + pp * 8 + oc
                w_toep[r, t:t + 3] = wc[oc, :]
                b_toep[r, 0] = bc[oc]

    # Linear(24, 16): PyTorch flat index oc*3 + p  ->  pooled row index p*8 + oc.
    w_out_r = jnp.transpose(p["w_out"].reshape(16, 8, 3), (0, 2, 1)).reshape(16, 24)
    b_out = p["b_out"].reshape(16, 1)

    # ConvTranspose1d(1,1,3,stride=3,padding=1,output_padding=1) as (24, 8);
    # row 23 is zero padding (8-row alignment of the decoder path).
    wd = np.asarray(p["w_dconv"])[0, 0]                    # (3,)
    m_dec = np.zeros((24, 8), np.float32)
    for i in range(8):
        for k in range(3):
            j = 3 * i - 1 + k
            if 0 <= j < 23:
                m_dec[j, i] = wd[k]
    b_dec = p["b_dconv"].reshape(1, 1)

    # Linear(23, 1) as a (1, 24) row with a zero tap for the padded row 23.
    w4 = np.zeros((1, 24), np.float32)
    w4[0, :23] = np.asarray(p["w_fc4"]).reshape(23)
    b4 = p["b_fc4"].reshape(1, 1)

    return (w_in, b_in, jnp.asarray(w_toep), jnp.asarray(b_toep),
            w_out_r, b_out, jnp.asarray(m_dec), b_dec, jnp.asarray(w4), b4)


# ---------------------------------------------------------------------------
# Pure-JAX reference (mirrors the PyTorch module semantics exactly)
# ---------------------------------------------------------------------------
def reference_forward(x, p, eps):
    B = x.shape[0]
    h = jnp.maximum(x @ p["w_in"].T + p["b_in"],
                    NEG_SLOPE * (x @ p["w_in"].T + p["b_in"]))       # (B, 8)
    cols = jnp.stack([h[:, t:t + 3] for t in range(6)], axis=1)      # (B, 6, 3)
    conv = (jnp.einsum("btk,ok->bot", cols, p["w_conv"][:, 0, :])
            + p["b_conv"][None, :, None])                            # (B, 8, 6)
    pooled = jnp.maximum(conv[:, :, 0::2], conv[:, :, 1::2])
    pooled = jnp.maximum(pooled, NEG_SLOPE * pooled)                 # (B, 8, 3)
    flat = pooled.reshape(B, 24)
    o = flat @ p["w_out"].T + p["b_out"]
    o = jnp.where(o > 0, o, jnp.exp(o) - 1.0)
    mu, logvar = o[:, :8], o[:, 8:]
    q = mu + logvar * eps
    y = jnp.zeros((B, 23), jnp.float32)
    wd = p["w_dconv"][0, 0]
    for i in range(8):
        for k in range(3):
            j = 3 * i - 1 + k
            if 0 <= j < 23:
                y = y.at[:, j].add(q[:, i] * wd[k])
    y = jnp.maximum(y + p["b_dconv"][0], 0.0)
    xhat = y @ p["w_fc4"].T + p["b_fc4"]
    lv2 = logvar ** 2
    kld = 0.5 * jnp.sum(mu ** 2 + lv2 - jnp.log(1e-8 + lv2) - 1.0) / (128 * 3)
    return xhat, kld


if __name__ == "__main__":
    key = jax.random.PRNGKey(0)
    k_param, k_x, k_eps = jax.random.split(key, 3)

    # Small model / moderate batch.  Inputs are produced directly in the
    # lane-major (features x batch) layout the kernel consumes, so no wrapper
    # transpose is needed.  B=1000 exercises the 128-aligned tiling (2 tiles
    # of 512 lanes) and the padded-lane KL masking.
    B = 1000
    xT = jax.random.normal(k_x, (3, B), jnp.float32)       # x, batch on lanes
    epsT = jax.random.normal(k_eps, (8, B), jnp.float32)   # torch.randn_like(logvar)

    params = init_params(k_param)
    kparams = make_kernel_params(params)

    x_hat, kld = vae_forward(xT, epsT, kparams)
    jax.block_until_ready((x_hat, kld))

    x_hat_ref, kld_ref = reference_forward(jnp.transpose(xT), params,
                                           jnp.transpose(epsT))
    assert x_hat.shape == (B, 1)
    assert jnp.allclose(x_hat, x_hat_ref, atol=1e-4, rtol=1e-4)
    assert jnp.allclose(kld, kld_ref, atol=1e-4, rtol=1e-4)

    print("KERNEL_OK")
</pallas_src>

<mosaic_0001>
module attributes {stable_mosaic.version = 11 : i64} {
  func.func @_vae_kernel(%arg0: i32, %arg1: memref<3x512xf32, #tpu.memory_space<vmem>>, %arg2: memref<8x512xf32, #tpu.memory_space<vmem>>, %arg3: memref<8x3xf32, #tpu.memory_space<vmem>>, %arg4: memref<8x1xf32, #tpu.memory_space<vmem>>, %arg5: memref<48x8xf32, #tpu.memory_space<vmem>>, %arg6: memref<48x1xf32, #tpu.memory_space<vmem>>, %arg7: memref<16x24xf32, #tpu.memory_space<vmem>>, %arg8: memref<16x1xf32, #tpu.memory_space<vmem>>, %arg9: memref<24x8xf32, #tpu.memory_space<vmem>>, %arg10: memref<1x1xf32, #tpu.memory_space<vmem>>, %arg11: memref<1x24xf32, #tpu.memory_space<vmem>>, %arg12: memref<1x1xf32, #tpu.memory_space<vmem>>, %arg13: memref<1x512xf32, #tpu.memory_space<vmem>>, %arg14: memref<1x1x1xf32, #tpu.memory_space<vmem>>) attributes {dimension_semantics = [#tpu.dimension_semantics<parallel>], iteration_bounds = array<i64: 2>, scalar_prefetch = 0 : i64, scratch_operands = 0 : i64, tpu.core_type = #tpu.core_type<tc>, window_params = [{transform_indices = @transform_0, window_bounds = array<i64: 3, 512>}, {transform_indices = @transform_1, window_bounds = array<i64: 8, 512>}, {pipeline_mode = #tpu.pipeline_mode<synchronous>, transform_indices = @transform_2, window_bounds = array<i64: 8, 3>}, {pipeline_mode = #tpu.pipeline_mode<synchronous>, transform_indices = @transform_3, window_bounds = array<i64: 8, 1>}, {pipeline_mode = #tpu.pipeline_mode<synchronous>, transform_indices = @transform_4, window_bounds = array<i64: 48, 8>}, {pipeline_mode = #tpu.pipeline_mode<synchronous>, transform_indices = @transform_5, window_bounds = array<i64: 48, 1>}, {pipeline_mode = #tpu.pipeline_mode<synchronous>, transform_indices = @transform_6, window_bounds = array<i64: 16, 24>}, {pipeline_mode = #tpu.pipeline_mode<synchronous>, transform_indices = @transform_7, window_bounds = array<i64: 16, 1>}, {pipeline_mode = #tpu.pipeline_mode<synchronous>, transform_indices = @transform_8, window_bounds = array<i64: 24, 8>}, {pipeline_mode = #tpu.pipeline_mode<synchronous>, transform_indices = @transform_9, window_bounds = array<i64: 1, 1>}, {pipeline_mode = #tpu.pipeline_mode<synchronous>, transform_indices = @transform_10, window_bounds = array<i64: 1, 24>}, {pipeline_mode = #tpu.pipeline_mode<synchronous>, transform_indices = @transform_11, window_bounds = array<i64: 1, 1>}, {transform_indices = @transform_12, window_bounds = array<i64: 1, 512>}, {transform_indices = @transform_13, window_bounds = array<i64: 1, 1, 1>}]} {
    %c0 = arith.constant 0 : index
    %c0_0 = arith.constant 0 : index
    %0 = vector.load %arg3[%c0, %c0_0] : memref<8x3xf32, #tpu.memory_space<vmem>>, vector<8x3xf32>
    %c0_1 = arith.constant 0 : index
    %c0_2 = arith.constant 0 : index
    %1 = vector.load %arg1[%c0_1, %c0_2] : memref<3x512xf32, #tpu.memory_space<vmem>>, vector<3x512xf32>
    %cst = arith.constant dense<0.000000e+00> : vector<8x512xf32>
    %2 = tpu.matmul %0, %1, %cst {dimension_numbers = #tpu.dot_dimension_numbers<[1], [0], [0], [1], [0, 0, 1, 1], [], []>} : vector<8x3xf32>, vector<3x512xf32>, vector<8x512xf32> -> vector<8x512xf32>
    %c0_3 = arith.constant 0 : index
    %c0_4 = arith.constant 0 : index
    %3 = vector.load %arg4[%c0_3, %c0_4] : memref<8x1xf32, #tpu.memory_space<vmem>>, vector<8x1xf32>
    %4 = vector.broadcast %3 : vector<8x1xf32> to vector<8x512xf32>
    %5 = arith.addf %2, %4 : vector<8x512xf32>
    %cst_5 = arith.constant 0.00999999977 : f32
    %6 = vector.broadcast %cst_5 : f32 to vector<8x512xf32>
    %7 = arith.mulf %6, %5 : vector<8x512xf32>
    %8 = arith.maximumf %5, %7 : vector<8x512xf32>
    %c0_6 = arith.constant 0 : index
    %c0_7 = arith.constant 0 : index
    %9 = vector.load %arg5[%c0_6, %c0_7] : memref<48x8xf32, #tpu.memory_space<vmem>>, vector<48x8xf32>
    %cst_8 = arith.constant dense<0.000000e+00> : vector<48x512xf32>
    %10 = tpu.matmul %9, %8, %cst_8 {dimension_numbers = #tpu.dot_dimension_numbers<[1], [0], [0], [1], [0, 0, 1, 1], [], []>} : vector<48x8xf32>, vector<8x512xf32>, vector<48x512xf32> -> vector<48x512xf32>
    %c0_9 = arith.constant 0 : index
    %c0_10 = arith.constant 0 : index
    %11 = vector.load %arg6[%c0_9, %c0_10] : memref<48x1xf32, #tpu.memory_space<vmem>>, vector<48x1xf32>
    %12 = vector.broadcast %11 : vector<48x1xf32> to vector<48x512xf32>
    %13 = arith.addf %10, %12 : vector<48x512xf32>
    %14 = vector.extract_strided_slice %13 {offsets = [0, 0], sizes = [24, 512], strides = [1, 1]} : vector<48x512xf32> to vector<24x512xf32>
    %15 = vector.extract_strided_slice %13 {offsets = [24, 0], sizes = [24, 512], strides = [1, 1]} : vector<48x512xf32> to vector<24x512xf32>
    %16 = arith.maximumf %14, %15 : vector<24x512xf32>
    %cst_11 = arith.constant 0.00999999977 : f32
    %17 = vector.broadcast %cst_11 : f32 to vector<24x512xf32>
    %18 = arith.mulf %17, %16 : vector<24x512xf32>
    %19 = arith.maximumf %16, %18 : vector<24x512xf32>
    %c0_12 = arith.constant 0 : index
    %c0_13 = arith.constant 0 : index
    %20 = vector.load %arg7[%c0_12, %c0_13] : memref<16x24xf32, #tpu.memory_space<vmem>>, vector<16x24xf32>
    %cst_14 = arith.constant dense<0.000000e+00> : vector<16x512xf32>
    %21 = tpu.matmul %20, %19, %cst_14 {dimension_numbers = #tpu.dot_dimension_numbers<[1], [0], [0], [1], [0, 0, 1, 1], [], []>} : vector<16x24xf32>, vector<24x512xf32>, vector<16x512xf32> -> vector<16x512xf32>
    %c0_15 = arith.constant 0 : index
    %c0_16 = arith.constant 0 : index
    %22 = vector.load %arg8[%c0_15, %c0_16] : memref<16x1xf32, #tpu.memory_space<vmem>>, vector<16x1xf32>
    %23 = vector.broadcast %22 : vector<16x1xf32> to vector<16x512xf32>
    %24 = arith.addf %21, %23 : vector<16x512xf32>
    %cst_17 = arith.constant 0.000000e+00 : f32
    %25 = vector.broadcast %cst_17 : f32 to vector<16x512xf32>
    %26 = arith.cmpf ogt, %24, %25 : vector<16x512xf32>
    %27 = math.exp %24 : vector<16x512xf32>
    %cst_18 = arith.constant 1.000000e+00 : f32
    %28 = vector.broadcast %cst_18 : f32 to vector<16x512xf32>
    %29 = arith.subf %27, %28 : vector<16x512xf32>
    %30 = arith.select %26, %24, %29 : vector<16x512xi1>, vector<16x512xf32>
    %31 = vector.extract_strided_slice %30 {offsets = [0, 0], sizes = [8, 512], strides = [1, 1]} : vector<16x512xf32> to vector<8x512xf32>
    %32 = vector.extract_strided_slice %30 {offsets = [8, 0], sizes = [8, 512], strides = [1, 1]} : vector<16x512xf32> to vector<8x512xf32>
    %c0_19 = arith.constant 0 : index
    %c0_20 = arith.constant 0 : index
    %33 = vector.load %arg2[%c0_19, %c0_20] : memref<8x512xf32, #tpu.memory_space<vmem>>, vector<8x512xf32>
    %34 = arith.mulf %32, %33 : vector<8x512xf32>
    %35 = arith.addf %31, %34 : vector<8x512xf32>
    %c0_21 = arith.constant 0 : index
    %c0_22 = arith.constant 0 : index
    %36 = vector.load %arg9[%c0_21, %c0_22] : memref<24x8xf32, #tpu.memory_space<vmem>>, vector<24x8xf32>
    %cst_23 = arith.constant dense<0.000000e+00> : vector<24x512xf32>
    %37 = tpu.matmul %36, %35, %cst_23 {dimension_numbers = #tpu.dot_dimension_numbers<[1], [0], [0], [1], [0, 0, 1, 1], [], []>} : vector<24x8xf32>, vector<8x512xf32>, vector<24x512xf32> -> vector<24x512xf32>
    %c0_24 = arith.constant 0 : index
    %c0_25 = arith.constant 0 : index
    %38 = vector.load %arg10[%c0_24, %c0_25] : memref<1x1xf32, #tpu.memory_space<vmem>>, vector<1x1xf32>
    %39 = vector.broadcast %38 : vector<1x1xf32> to vector<24x512xf32>
    %40 = arith.addf %37, %39 : vector<24x512xf32>
    %cst_26 = arith.constant 0.000000e+00 : f32
    %41 = vector.broadcast %cst_26 : f32 to vector<24x512xf32>
    %42 = arith.maximumf %40, %41 : vector<24x512xf32>
    %c0_27 = arith.constant 0 : index
    %c0_28 = arith.constant 0 : index
    %43 = vector.load %arg11[%c0_27, %c0_28] : memref<1x24xf32, #tpu.memory_space<vmem>>, vector<1x24xf32>
    %cst_29 = arith.constant dense<0.000000e+00> : vector<1x512xf32>
    %44 = tpu.matmul %43, %42, %cst_29 {dimension_numbers = #tpu.dot_dimension_numbers<[1], [0], [0], [1], [0, 0, 1, 1], [], []>} : vector<1x24xf32>, vector<24x512xf32>, vector<1x512xf32> -> vector<1x512xf32>
    %c0_30 = arith.constant 0 : index
    %c0_31 = arith.constant 0 : index
    %45 = vector.load %arg12[%c0_30, %c0_31] : memref<1x1xf32, #tpu.memory_space<vmem>>, vector<1x1xf32>
    %46 = vector.broadcast %45 : vector<1x1xf32> to vector<1x512xf32>
    %47 = arith.addf %44, %46 : vector<1x512xf32>
    %c0_32 = arith.constant 0 : index
    %c0_33 = arith.constant 0 : index
    %48 = vector.load %arg13[%c0_32, %c0_33] : memref<1x512xf32, #tpu.memory_space<vmem>>, vector<1x512xf32>
    tpu.vector_store %arg13[%c0_32, %c0_33], %47 {strides = array<i32>} : memref<1x512xf32, #tpu.memory_space<vmem>>, vector<1x512xf32>,
    %49 = tpu.iota {dimensions = array<i32: 1>} : vector<1x512xi32>
    %c512_i32 = arith.constant 512 : i32
    %50 = arith.muli %arg0, %c512_i32 : i32
    %51 = vector.broadcast %50 : i32 to vector<1x512xi32>
    %52 = arith.addi %51, %49 : vector<1x512xi32>
    %c1000_i32 = arith.constant 1000 : i32
    %53 = vector.broadcast %c1000_i32 : i32 to vector<1x512xi32>
    %54 = arith.cmpi slt, %52, %53 : vector<1x512xi32>
    %55 = arith.mulf %32, %32 : vector<8x512xf32>
    %56 = arith.mulf %31, %31 : vector<8x512xf32>
    %57 = arith.addf %56, %55 : vector<8x512xf32>
    %cst_34 = arith.constant 9.99999993E-9 : f32
    %58 = vector.broadcast %cst_34 : f32 to vector<8x512xf32>
    %59 = arith.addf %58, %55 : vector<8x512xf32>
    %60 = math.log %59 : vector<8x512xf32>
    %61 = arith.subf %57, %60 : vector<8x512xf32>
    %cst_35 = arith.constant 1.000000e+00 : f32
    %62 = vector.broadcast %cst_35 : f32 to vector<8x512xf32>
    %63 = arith.subf %61, %62 : vector<8x512xf32>
    %cst_36 = arith.constant 0.000000e+00 : f32
    %64 = vector.shape_cast %54 : vector<1x512xi1> to vector<1x512xi1>
    %65 = vector.broadcast %64 : vector<1x512xi1> to vector<8x512xi1>
    %66 = vector.broadcast %cst_36 : f32 to vector<8x512xf32>
    %67 = arith.select %65, %63, %66 : vector<8x512xi1>, vector<8x512xf32>
    %cst_37 = arith.constant dense<0.000000e+00> : vector<8xf32>
    %68 = vector.multi_reduction <add>, %67, %cst_37 [1] : vector<8x512xf32> to vector<8xf32>
    %69 = vector.shape_cast %68 : vector<8xf32> to vector<8x1xf32>
    %cst_38 = arith.constant dense<0.000000e+00> : vector<1xf32>
    %70 = vector.multi_reduction <add>, %69, %cst_38 [0] : vector<8x1xf32> to vector<1xf32>
    %71 = vector.shape_cast %70 : vector<1xf32> to vector<1x1xf32>
    %cst_39 = arith.constant 0.00130208337 : f32
    %72 = vector.broadcast %cst_39 : f32 to vector<1x1xf32>
    %73 = arith.mulf %72, %71 : vector<1x1xf32>
    %74 = vector.shape_cast %73 : vector<1x1xf32> to vector<1x1x1xf32>
    %c0_40 = arith.constant 0 : index
    %c0_41 = arith.constant 0 : index
    %c0_42 = arith.constant 0 : index
    %75 = vector.load %arg14[%c0_40, %c0_41, %c0_42] : memref<1x1x1xf32, #tpu.memory_space<vmem>>, vector<1x1x1xf32>
    tpu.vector_store %arg14[%c0_40, %c0_41, %c0_42], %74 {strides = array<i32>} : memref<1x1x1xf32, #tpu.memory_space<vmem>>, vector<1x1x1xf32>,
    return
  }
  func.func @transform_0(%arg0: i32) -> (i32, i32) {
    %c0_i32 = arith.constant 0 : i32
    %c0_i32_0 = arith.constant 0 : i32
    return %c0_i32, %arg0 : i32, i32
  }
  func.func @transform_1(%arg0: i32) -> (i32, i32) {
    %c0_i32 = arith.constant 0 : i32
    %c0_i32_0 = arith.constant 0 : i32
    return %c0_i32, %arg0 : i32, i32
  }
  func.func @transform_2(%arg0: i32) -> (i32, i32) {
    %c0_i32 = arith.constant 0 : i32
    %c0_i32_0 = arith.constant 0 : i32
    %c0_i32_1 = arith.constant 0 : i32
    return %c0_i32, %c0_i32_0 : i32, i32
  }
  func.func @transform_3(%arg0: i32) -> (i32, i32) {
    %c0_i32 = arith.constant 0 : i32
    %c0_i32_0 = arith.constant 0 : i32
    %c0_i32_1 = arith.constant 0 : i32
    return %c0_i32, %c0_i32_0 : i32, i32
  }
  func.func @transform_4(%arg0: i32) -> (i32, i32) {
    %c0_i32 = arith.constant 0 : i32
    %c0_i32_0 = arith.constant 0 : i32
    %c0_i32_1 = arith.constant 0 : i32
    return %c0_i32, %c0_i32_0 : i32, i32
  }
  func.func @transform_5(%arg0: i32) -> (i32, i32) {
    %c0_i32 = arith.constant 0 : i32
    %c0_i32_0 = arith.constant 0 : i32
    %c0_i32_1 = arith.constant 0 : i32
    return %c0_i32, %c0_i32_0 : i32, i32
  }
  func.func @transform_6(%arg0: i32) -> (i32, i32) {
    %c0_i32 = arith.constant 0 : i32
    %c0_i32_0 = arith.constant 0 : i32
    %c0_i32_1 = arith.constant 0 : i32
    return %c0_i32, %c0_i32_0 : i32, i32
  }
  func.func @transform_7(%arg0: i32) -> (i32, i32) {
    %c0_i32 = arith.constant 0 : i32
    %c0_i32_0 = arith.constant 0 : i32
    %c0_i32_1 = arith.constant 0 : i32
    return %c0_i32, %c0_i32_0 : i32, i32
  }
  func.func @transform_8(%arg0: i32) -> (i32, i32) {
    %c0_i32 = arith.constant 0 : i32
    %c0_i32_0 = arith.constant 0 : i32
    %c0_i32_1 = arith.constant 0 : i32
    return %c0_i32, %c0_i32_0 : i32, i32
  }
  func.func @transform_9(%arg0: i32) -> (i32, i32) {
    %c0_i32 = arith.constant 0 : i32
    %c0_i32_0 = arith.constant 0 : i32
    %c0_i32_1 = arith.constant 0 : i32
    return %c0_i32, %c0_i32_0 : i32, i32
  }
  func.func @transform_10(%arg0: i32) -> (i32, i32) {
    %c0_i32 = arith.constant 0 : i32
    %c0_i32_0 = arith.constant 0 : i32
    %c0_i32_1 = arith.constant 0 : i32
    return %c0_i32, %c0_i32_0 : i32, i32
  }
  func.func @transform_11(%arg0: i32) -> (i32, i32) {
    %c0_i32 = arith.constant 0 : i32
    %c0_i32_0 = arith.constant 0 : i32
    %c0_i32_1 = arith.constant 0 : i32
    return %c0_i32, %c0_i32_0 : i32, i32
  }
  func.func @transform_12(%arg0: i32) -> (i32, i32) {
    %c0_i32 = arith.constant 0 : i32
    %c0_i32_0 = arith.constant 0 : i32
    return %c0_i32, %arg0 : i32, i32
  }
  func.func @transform_13(%arg0: i32) -> (i32, i32, i32) {
    %c0_i32 = arith.constant 0 : i32
    %c0_i32_0 = arith.constant 0 : i32
    %c0_i32_1 = arith.constant 0 : i32
    return %arg0, %c0_i32, %c0_i32_0 : i32, i32, i32
  }
}

</mosaic_0001>

<llo_original>
// kernel: tpu_custom_call.1
$region0: #{tpu_custom_call.1}
  #allocation0 [shape = 'u32[]', space=smem, size = 0x4, offset = 0x4, fixed_abs, tag = 'smem constant byte address 0x4 - core index']
  #allocation1 [shape = 'u32[144,128]{1,0:T(1,128)}', space=vmem, size = 0x12000, scoped, tag = 'internal scratch']
  #allocation2 [shape = 'f32[1,1]{1,0:T(1,128)S(1)}', space=vmem, size = 0x200, scoped, tag = 'scoped memory for tpu_custom_call.1']
  #allocation3 [shape = 'f32[1,1]{1,0:T(1,128)S(1)}', space=vmem, size = 0x200, scoped, tag = 'scoped memory for tpu_custom_call.1']
  %s0 = inlined_call_operand.vmem [shape: f32[3,1024], index: 0, kind: input, shape index: {}]
  %s1 = inlined_call_operand.vmem [shape: f32[8,1024], index: 1, kind: input, shape index: {}]
  %s2 = inlined_call_operand.vmem [shape: f32[8,3], index: 2, kind: input, shape index: {}]
  %s3 = inlined_call_operand.vmem [shape: f32[8,1], index: 3, kind: input, shape index: {}]
  %s4 = inlined_call_operand.vmem [shape: f32[48,8], index: 4, kind: input, shape index: {}]
  %s5 = inlined_call_operand.vmem [shape: f32[48,1], index: 5, kind: input, shape index: {}]
  %s6 = inlined_call_operand.vmem [shape: f32[16,24], index: 6, kind: input, shape index: {}]
  %s7 = inlined_call_operand.vmem [shape: f32[16,1], index: 7, kind: input, shape index: {}]
  %s8 = inlined_call_operand.vmem [shape: f32[24,8], index: 8, kind: input, shape index: {}]
  %s9 = inlined_call_operand.<no memory space> [shape: f32[1,1], index: 9, kind: input, shape index: {}]
  %s10 = inlined_call_operand.vmem [shape: f32[1,24], index: 10, kind: input, shape index: {}]
  %s11 = inlined_call_operand.<no memory space> [shape: f32[1,1], index: 11, kind: input, shape index: {}]
  %s12 = inlined_call_operand.hbm [shape: f32[1,1024], index: 12, kind: output, shape index: {0}]
  %s13 = inlined_call_operand.vmem [shape: f32[2,1,1], index: 13, kind: output, shape index: {1}]
  %14 = xla_tuple %s12, %s13
  %s15 = sld [smem:[#allocation0]]
  $region89: #{tpu_custom_call.1} parent=0
    _
  %s17 = ssub.s32 1, %s15
  %s18 = scalar_select 0, %s17, %s15
  %v19 = vstv %s9
  %20 = vst [vmem:[#allocation2] sm:$0x1] %v19
  %v21 = vstv %s11
  %22 = vst [vmem:[#allocation3] sm:$0x1] %v21
  $region1: #{tpu_custom_call.1} parent=0
    #allocation4 [shape = 'u8[4096]{0}', space=vmem, size = 0x1000, scoped, tag = 'output window, operand 0']
    #allocation5 [shape = 's32[2]{0}', space=sflag, size = 0x8, scoped, tag = 'scoped memory for tpu_custom_call.1']
    %23 = vsyncpa [#allocation5], 0
    %s24 = scalar_lea.sflag [#allocation5], 1
    %25 = vsyncpa %s24, 0
    loop: start=0, step=1, limit=4
    $region2: #{tpu_custom_call.1} parent=1 // loop_pre_header
      _
    $region3: #{tpu_custom_call.1} parent=1 // loop_header
      %s27 = sphi 0, %s31
      %p28 = scmp.ge.s32.totalorder %s27, 4
      %s37 = sphi 0, %s39
      %s40 = sphi 0, %s37
      %s41 = sphi 0, %s40
      %s57 = sphi 0, %s41
      %s63 = sphi 0, %s65
      %s66 = sphi 0, %s63
      %s67 = sphi 0, %s66
      %s83 = sphi 0, %s67
      %s87 = sphi 0, %s87
      %s89 = sphi 0, %s87
      %s90 = sphi 0, %s89
      %s104 = sphi 0, %s90
      %s108 = sphi 0, %s108
      %s110 = sphi 0, %s108
      %s111 = sphi 0, %s110
      %s125 = sphi 0, %s111
      %s129 = sphi 0, %s129
      %s131 = sphi 0, %s129
      %s132 = sphi 0, %s131
      %s146 = sphi 0, %s132
      %s150 = sphi 0, %s150
      %s152 = sphi 0, %s150
      %s153 = sphi 0, %s152
      %s167 = sphi 0, %s153
      %s171 = sphi 0, %s171
      %s173 = sphi 0, %s171
      %s174 = sphi 0, %s173
      %s188 = sphi 0, %s174
      %s192 = sphi 0, %s192
      %s194 = sphi 0, %s192
      %s195 = sphi 0, %s194
      %s209 = sphi 0, %s195
      %s213 = sphi 0, %s213
      %s215 = sphi 0, %s213
      %s216 = sphi 0, %s215
      %s230 = sphi 0, %s216
      %s234 = sphi 0, %s234
      %s236 = sphi 0, %s234
      %s237 = sphi 0, %s236
      %s251 = sphi 0, %s237
      %s255 = sphi 0, %s255
      %s257 = sphi 0, %s255
      %s258 = sphi 0, %s257
      %s272 = sphi 0, %s258
      %s276 = sphi 0, %s276
      %s278 = sphi 0, %s276
      %s279 = sphi 0, %s278
      %s293 = sphi 0, %s279
      %s299 = sphi 0, %s301
      %s302 = sphi 0, %s299
      %s303 = sphi 0, %s302
      %s319 = sphi 0, %s303
      %s325 = sphi 0, %s327
      %s328 = sphi 0, %s325
      %s329 = sphi 0, %s328
      %s345 = sphi 0, %s329
    $region4: #{tpu_custom_call.1} parent=1 // loop_header_branch
      %30 = sbr.rel (%p28) target = $region8
    $region5: #{tpu_custom_call.1} parent=1 // loop_body
      %s32 = ssub.s32 %s27, 1
      %s33 = ssub.s32 %s27, 2
      %s34 = sadd.s32 %s27, 1
      %s35 = ssub.s32 %s27, %s34
      %p36 = scmp.eq.s32.totalorder %s35, 0
      %s38 = sadd.s32 %s37, 1
      %s39 = scalar_select %p36, %s37, %s38
      %p42 = pneg %p36
      %p43 = scmp.eq.s32.totalorder %s27, 1
      %p44 = por %p42, %p43
      %p45 = scmp.ne.s32.totalorder %s37, %s40
      %p46 = scmp.eq.s32.totalorder %s27, 0
      %p47 = por %p45, %p46
      %p48 = scmp.ne.s32.totalorder %s37, %s40
      %p49 = scmp.eq.s32.totalorder %s32, 1
      %p50 = por %p48, %p49
      %p51 = scmp.ne.s32.totalorder %s40, %s41
      %p52 = scmp.eq.s32.totalorder %s32, 0
      %p53 = por %p51, %p52
      %p54 = scmp.ne.s32.totalorder %s40, %s41
      %p55 = scmp.eq.s32.totalorder %s33, 1
      %p56 = por %p54, %p55
      %p58 = scmp.ne.s32.totalorder %s41, %s57
      %p59 = scmp.eq.s32.totalorder %s33, 0
      %p60 = por %p58, %p59
      %s61 = ssub.s32 %s27, %s34
      %p62 = scmp.eq.s32.totalorder %s61, 0
      %s64 = sadd.s32 %s63, 1
      %s65 = scalar_select %p62, %s63, %s64
      %p68 = pneg %p62
      %p69 = scmp.eq.s32.totalorder %s27, 1
      %p70 = por %p68, %p69
      %p71 = scmp.ne.s32.totalorder %s63, %s66
      %p72 = scmp.eq.s32.totalorder %s27, 0
      %p73 = por %p71, %p72
      %p74 = scmp.ne.s32.totalorder %s63, %s66
      %p75 = scmp.eq.s32.totalorder %s32, 1
      %p76 = por %p74, %p75
      %p77 = scmp.ne.s32.totalorder %s66, %s67
      %p78 = scmp.eq.s32.totalorder %s32, 0
      %p79 = por %p77, %p78
      %p80 = scmp.ne.s32.totalorder %s66, %s67
      %p81 = scmp.eq.s32.totalorder %s33, 1
      %p82 = por %p80, %p81
      %p84 = scmp.ne.s32.totalorder %s67, %s83
      %p85 = scmp.eq.s32.totalorder %s33, 0
      %p86 = por %p84, %p85
      %s88 = sadd.s32 %s87, 1
      %p91 = scmp.eq.s32.totalorder %s27, 1
      %p92 = scmp.ne.s32.totalorder %s87, %s89
      %p93 = scmp.eq.s32.totalorder %s27, 0
      %p94 = por %p92, %p93
      %p95 = scmp.ne.s32.totalorder %s87, %s89
      %p96 = scmp.eq.s32.totalorder %s32, 1
      %p97 = por %p95, %p96
      %p98 = scmp.ne.s32.totalorder %s89, %s90
      %p99 = scmp.eq.s32.totalorder %s32, 0
      %p100 = por %p98, %p99
      %p101 = scmp.ne.s32.totalorder %s89, %s90
      %p102 = scmp.eq.s32.totalorder %s33, 1
      %p103 = por %p101, %p102
      %p105 = scmp.ne.s32.totalorder %s90, %s104
      %p106 = scmp.eq.s32.totalorder %s33, 0
      %p107 = por %p105, %p106
      %s109 = sadd.s32 %s108, 1
      %p112 = scmp.eq.s32.totalorder %s27, 1
      %p113 = scmp.ne.s32.totalorder %s108, %s110
      %p114 = scmp.eq.s32.totalorder %s27, 0
      %p115 = por %p113, %p114
      %p116 = scmp.ne.s32.totalorder %s108, %s110
      %p117 = scmp.eq.s32.totalorder %s32, 1
      %p118 = por %p116, %p117
      %p119 = scmp.ne.s32.totalorder %s110, %s111
      %p120 = scmp.eq.s32.totalorder %s32, 0
      %p121 = por %p119, %p120
      %p122 = scmp.ne.s32.totalorder %s110, %s111
      %p123 = scmp.eq.s32.totalorder %s33, 1
      %p124 = por %p122, %p123
      %p126 = scmp.ne.s32.totalorder %s111, %s125
      %p127 = scmp.eq.s32.totalorder %s33, 0
      %p128 = por %p126, %p127
      %s130 = sadd.s32 %s129, 1
      %p133 = scmp.eq.s32.totalorder %s27, 1
      %p134 = scmp.ne.s32.totalorder %s129, %s131
      %p135 = scmp.eq.s32.totalorder %s27, 0
      %p136 = por %p134, %p135
      %p137 = scmp.ne.s32.totalorder %s129, %s131
      %p138 = scmp.eq.s32.totalorder %s32, 1
      %p139 = por %p137, %p138
      %p140 = scmp.ne.s32.totalorder %s131, %s132
      %p141 = scmp.eq.s32.totalorder %s32, 0
      %p142 = por %p140, %p141
      %p143 = scmp.ne.s32.totalorder %s131, %s132
      %p144 = scmp.eq.s32.totalorder %s33, 1
      %p145 = por %p143, %p144
      %p147 = scmp.ne.s32.totalorder %s132, %s146
      %p148 = scmp.eq.s32.totalorder %s33, 0
      %p149 = por %p147, %p148
      %s151 = sadd.s32 %s150, 1
      %p154 = scmp.eq.s32.totalorder %s27, 1
      %p155 = scmp.ne.s32.totalorder %s150, %s152
      %p156 = scmp.eq.s32.totalorder %s27, 0
      %p157 = por %p155, %p156
      %p158 = scmp.ne.s32.totalorder %s150, %s152
      %p159 = scmp.eq.s32.totalorder %s32, 1
      %p160 = por %p158, %p159
      %p161 = scmp.ne.s32.totalorder %s152, %s153
      %p162 = scmp.eq.s32.totalorder %s32, 0
      %p163 = por %p161, %p162
      %p164 = scmp.ne.s32.totalorder %s152, %s153
      %p165 = scmp.eq.s32.totalorder %s33, 1
      %p166 = por %p164, %p165
      %p168 = scmp.ne.s32.totalorder %s153, %s167
      %p169 = scmp.eq.s32.totalorder %s33, 0
      %p170 = por %p168, %p169
      %s172 = sadd.s32 %s171, 1
      %p175 = scmp.eq.s32.totalorder %s27, 1
      %p176 = scmp.ne.s32.totalorder %s171, %s173
      %p177 = scmp.eq.s32.totalorder %s27, 0
      %p178 = por %p176, %p177
      %p179 = scmp.ne.s32.totalorder %s171, %s173
      %p180 = scmp.eq.s32.totalorder %s32, 1
      %p181 = por %p179, %p180
      %p182 = scmp.ne.s32.totalorder %s173, %s174
      %p183 = scmp.eq.s32.totalorder %s32, 0
      %p184 = por %p182, %p183
      %p185 = scmp.ne.s32.totalorder %s173, %s174
      %p186 = scmp.eq.s32.totalorder %s33, 1
      %p187 = por %p185, %p186
      %p189 = scmp.ne.s32.totalorder %s174, %s188
      %p190 = scmp.eq.s32.totalorder %s33, 0
      %p191 = por %p189, %p190
      %s193 = sadd.s32 %s192, 1
      %p196 = scmp.eq.s32.totalorder %s27, 1
      %p197 = scmp.ne.s32.totalorder %s192, %s194
      %p198 = scmp.eq.s32.totalorder %s27, 0
      %p199 = por %p197, %p198
      %p200 = scmp.ne.s32.totalorder %s192, %s194
      %p201 = scmp.eq.s32.totalorder %s32, 1
      %p202 = por %p200, %p201
      %p203 = scmp.ne.s32.totalorder %s194, %s195
      %p204 = scmp.eq.s32.totalorder %s32, 0
      %p205 = por %p203, %p204
      %p206 = scmp.ne.s32.totalorder %s194, %s195
      %p207 = scmp.eq.s32.totalorder %s33, 1
      %p208 = por %p206, %p207
      %p210 = scmp.ne.s32.totalorder %s195, %s209
      %p211 = scmp.eq.s32.totalorder %s33, 0
      %p212 = por %p210, %p211
      %s214 = sadd.s32 %s213, 1
      %p217 = scmp.eq.s32.totalorder %s27, 1
      %p218 = scmp.ne.s32.totalorder %s213, %s215
      %p219 = scmp.eq.s32.totalorder %s27, 0
      %p220 = por %p218, %p219
      %p221 = scmp.ne.s32.totalorder %s213, %s215
      %p222 = scmp.eq.s32.totalorder %s32, 1
      %p223 = por %p221, %p222
      %p224 = scmp.ne.s32.totalorder %s215, %s216
      %p225 = scmp.eq.s32.totalorder %s32, 0
      %p226 = por %p224, %p225
      %p227 = scmp.ne.s32.totalorder %s215, %s216
      %p228 = scmp.eq.s32.totalorder %s33, 1
      %p229 = por %p227, %p228
      %p231 = scmp.ne.s32.totalorder %s216, %s230
      %p232 = scmp.eq.s32.totalorder %s33, 0
      %p233 = por %p231, %p232
      %s235 = sadd.s32 %s234, 1
      %p238 = scmp.eq.s32.totalorder %s27, 1
      %p239 = scmp.ne.s32.totalorder %s234, %s236
      %p240 = scmp.eq.s32.totalorder %s27, 0
      %p241 = por %p239, %p240
      %p242 = scmp.ne.s32.totalorder %s234, %s236
      %p243 = scmp.eq.s32.totalorder %s32, 1
      %p244 = por %p242, %p243
      %p245 = scmp.ne.s32.totalorder %s236, %s237
      %p246 = scmp.eq.s32.totalorder %s32, 0
      %p247 = por %p245, %p246
      %p248 = scmp.ne.s32.totalorder %s236, %s237
      %p249 = scmp.eq.s32.totalorder %s33, 1
      %p250 = por %p248, %p249
      %p252 = scmp.ne.s32.totalorder %s237, %s251
      %p253 = scmp.eq.s32.totalorder %s33, 0
      %p254 = por %p252, %p253
      %s256 = sadd.s32 %s255, 1
      %p259 = scmp.eq.s32.totalorder %s27, 1
      %p260 = scmp.ne.s32.totalorder %s255, %s257
      %p261 = scmp.eq.s32.totalorder %s27, 0
      %p262 = por %p260, %p261
      %p263 = scmp.ne.s32.totalorder %s255, %s257
      %p264 = scmp.eq.s32.totalorder %s32, 1
      %p265 = por %p263, %p264
      %p266 = scmp.ne.s32.totalorder %s257, %s258
      %p267 = scmp.eq.s32.totalorder %s32, 0
      %p268 = por %p266, %p267
      %p269 = scmp.ne.s32.totalorder %s257, %s258
      %p270 = scmp.eq.s32.totalorder %s33, 1
      %p271 = por %p269, %p270
      %p273 = scmp.ne.s32.totalorder %s258, %s272
      %p274 = scmp.eq.s32.totalorder %s33, 0
      %p275 = por %p273, %p274
      %s277 = sadd.s32 %s276, 1
      %p280 = scmp.eq.s32.totalorder %s27, 1
      %p281 = scmp.ne.s32.totalorder %s276, %s278
      %p282 = scmp.eq.s32.totalorder %s27, 0
      %p283 = por %p281, %p282
      %p284 = scmp.ne.s32.totalorder %s276, %s278
      %p285 = scmp.eq.s32.totalorder %s32, 1
      %p286 = por %p284, %p285
      %p287 = scmp.ne.s32.totalorder %s278, %s279
      %p288 = scmp.eq.s32.totalorder %s32, 0
      %p289 = por %p287, %p288
      %p290 = scmp.ne.s32.totalorder %s278, %s279
      %p291 = scmp.eq.s32.totalorder %s33, 1
      %p292 = por %p290, %p291
      %p294 = scmp.ne.s32.totalorder %s279, %s293
      %p295 = scmp.eq.s32.totalorder %s33, 0
      %p296 = por %p294, %p295
      %s297 = ssub.s32 %s27, %s34
      %p298 = scmp.eq.s32.totalorder %s297, 0
      %s300 = sadd.s32 %s299, 1
      %s301 = scalar_select %p298, %s299, %s300
      %p304 = pneg %p298
      %p305 = scmp.eq.s32.totalorder %s27, 1
      %p306 = por %p304, %p305
      %p307 = scmp.ne.s32.totalorder %s299, %s302
      %p308 = scmp.eq.s32.totalorder %s27, 0
      %p309 = por %p307, %p308
      %p310 = scmp.ne.s32.totalorder %s299, %s302
      %p311 = scmp.eq.s32.totalorder %s32, 1
      %p312 = por %p310, %p311
      %p313 = scmp.ne.s32.totalorder %s302, %s303
      %p314 = scmp.eq.s32.totalorder %s32, 0
      %p315 = por %p313, %p314
      %p316 = scmp.ne.s32.totalorder %s302, %s303
      %p317 = scmp.eq.s32.totalorder %s33, 1
      %p318 = por %p316, %p317
      %p320 = scmp.ne.s32.totalorder %s303, %s319
      %p321 = scmp.eq.s32.totalorder %s33, 0
      %p322 = por %p320, %p321
      %s323 = ssub.s32 %s27, %s34
      %p324 = scmp.eq.s32.totalorder %s323, 0
      %s326 = sadd.s32 %s325, 1
      %s327 = scalar_select %p324, %s325, %s326
      %p330 = pneg %p324
      %p331 = scmp.eq.s32.totalorder %s27, 1
      %p332 = por %p330, %p331
      %p333 = scmp.ne.s32.totalorder %s325, %s328
      %p334 = scmp.eq.s32.totalorder %s27, 0
      %p335 = por %p333, %p334
      %p336 = scmp.ne.s32.totalorder %s325, %s328
      %p337 = scmp.eq.s32.totalorder %s32, 1
      %p338 = por %p336, %p337
      %p339 = scmp.ne.s32.totalorder %s328, %s329
      %p340 = scmp.eq.s32.totalorder %s32, 0
      %p341 = por %p339, %p340
      %p342 = scmp.ne.s32.totalorder %s328, %s329
      %p343 = scmp.eq.s32.totalorder %s33, 1
      %p344 = por %p342, %p343
      %p346 = scmp.ne.s32.totalorder %s329, %s345
      %p347 = scmp.eq.s32.totalorder %s33, 0
      %p348 = por %p346, %p347
      %p349 = scmp.le.s32.totalorder 1, %s27
      %p350 = scmp.lt.s32.totalorder %s27, 3
      %p351 = pnand %p349, %p350
      %p352 = pneg %p351
      // Predicated region
      $region9: #{tpu_custom_call.1} parent=5 // pred_check
        _
      $region10: #{tpu_custom_call.1} parent=5 // pred_check_branch
        %354 = sbr.rel (%p351) target = $region12
      $region11: #{tpu_custom_call.1} parent=5 // pred_region
        %s355 = ssub.s32 %s27, 1
        // Predicated region
        $region13: #{tpu_custom_call.1} parent=11 // pred_check
          %p356 = pneg %p100
        $region14: #{tpu_custom_call.1} parent=11 // pred_check_branch
          %358 = sbr.rel (%p356) target = $region16
        $region15: #{tpu_custom_call.1} parent=11 // pred_region
          _
        $region16: #{tpu_custom_call.1} parent=11 // pred_fallthru
          _
        // Predicated region
        $region17: #{tpu_custom_call.1} parent=11 // pred_check
          %p359 = pneg %p121
        $region18: #{tpu_custom_call.1} parent=11 // pred_check_branch
          %361 = sbr.rel (%p359) target = $region20
        $region19: #{tpu_custom_call.1} parent=11 // pred_region
          _
        $region20: #{tpu_custom_call.1} parent=11 // pred_fallthru
          _
        // Predicated region
        $region21: #{tpu_custom_call.1} parent=11 // pred_check
          %p362 = pneg %p142
        $region22: #{tpu_custom_call.1} parent=11 // pred_check_branch
          %364 = sbr.rel (%p362) target = $region24
        $region23: #{tpu_custom_call.1} parent=11 // pred_region
          _
        $region24: #{tpu_custom_call.1} parent=11 // pred_fallthru
          _
        // Predicated region
        $region25: #{tpu_custom_call.1} parent=11 // pred_check
          %p365 = pneg %p163
        $region26: #{tpu_custom_call.1} parent=11 // pred_check_branch
          %367 = sbr.rel (%p365) target = $region28
        $region27: #{tpu_custom_call.1} parent=11 // pred_region
          _
        $region28: #{tpu_custom_call.1} parent=11 // pred_fallthru
          _
        // Predicated region
        $region29: #{tpu_custom_call.1} parent=11 // pred_check
          %p368 = pneg %p184
        $region30: #{tpu_custom_call.1} parent=11 // pred_check_branch
          %370 = sbr.rel (%p368) target = $region32
        $region31: #{tpu_custom_call.1} parent=11 // pred_region
          _
        $region32: #{tpu_custom_call.1} parent=11 // pred_fallthru
          _
        // Predicated region
        $region33: #{tpu_custom_call.1} parent=11 // pred_check
          %p371 = pneg %p205
        $region34: #{tpu_custom_call.1} parent=11 // pred_check_branch
          %373 = sbr.rel (%p371) target = $region36
        $region35: #{tpu_custom_call.1} parent=11 // pred_region
          _
        $region36: #{tpu_custom_call.1} parent=11 // pred_fallthru
          _
        // Predicated region
        $region37: #{tpu_custom_call.1} parent=11 // pred_check
          %p374 = pneg %p226
        $region38: #{tpu_custom_call.1} parent=11 // pred_check_branch
          %376 = sbr.rel (%p374) target = $region40
        $region39: #{tpu_custom_call.1} parent=11 // pred_region
          _
        $region40: #{tpu_custom_call.1} parent=11 // pred_fallthru
          _
        // Predicated region
        $region41: #{tpu_custom_call.1} parent=11 // pred_check
          %p377 = pneg %p247
        $region42: #{tpu_custom_call.1} parent=11 // pred_check_branch
          %379 = sbr.rel (%p377) target = $region44
        $region43: #{tpu_custom_call.1} parent=11 // pred_region
          _
        $region44: #{tpu_custom_call.1} parent=11 // pred_fallthru
          _
        // Predicated region
        $region45: #{tpu_custom_call.1} parent=11 // pred_check
          %p380 = pneg %p268
        $region46: #{tpu_custom_call.1} parent=11 // pred_check_branch
          %382 = sbr.rel (%p380) target = $region48
        $region47: #{tpu_custom_call.1} parent=11 // pred_region
          _
        $region48: #{tpu_custom_call.1} parent=11 // pred_fallthru
          _
        // Predicated region
        $region49: #{tpu_custom_call.1} parent=11 // pred_check
          %p383 = pneg %p289
        $region50: #{tpu_custom_call.1} parent=11 // pred_check_branch
          %385 = sbr.rel (%p383) target = $region52
        $region51: #{tpu_custom_call.1} parent=11 // pred_region
          _
        $region52: #{tpu_custom_call.1} parent=11 // pred_fallthru
          _
      $region12: #{tpu_custom_call.1} parent=5 // pred_fallthru
        _
      %p386 = scmp.lt.s32.totalorder %s27, 2
      // Predicated region
      $region53: #{tpu_custom_call.1} parent=5 // pred_check
        %p387 = pneg %p386
      $region54: #{tpu_custom_call.1} parent=5 // pred_check_branch
        %389 = sbr.rel (%p387) target = $region56
      $region55: #{tpu_custom_call.1} parent=5 // pred_region
        // Predicated region
        $region57: #{tpu_custom_call.1} parent=55 // pred_check
          %p390 = pneg %p47
        $region58: #{tpu_custom_call.1} parent=55 // pred_check_branch
          %392 = sbr.rel (%p390) target = $region60
        $region59: #{tpu_custom_call.1} parent=55 // pred_region
          %s393 = smul.u32 4, %s27
          %p394 = scmp.lt.s32.totalorder %s393, 7
          %s395 = scalar_select %p394, %s393, 7
          %s396 = smul.addr %s395, 4
          %s397 = scalar_lea.vmem %s0, %s396
          %s398 = smul.u32 4, %s27
        $region60: #{tpu_custom_call.1} parent=55 // pred_fallthru
          _
        // Predicated region
        $region61: #{tpu_custom_call.1} parent=55 // pred_check
          %p399 = pneg %p73
        $region62: #{tpu_custom_call.1} parent=55 // pred_check_branch
          %401 = sbr.rel (%p399) target = $region64
        $region63: #{tpu_custom_call.1} parent=55 // pred_region
          %s402 = smul.u32 4, %s27
          %p403 = scmp.lt.s32.totalorder %s402, 7
          %s404 = scalar_select %p403, %s402, 7
          %s405 = smul.addr %s404, 8
          %s406 = scalar_lea.vmem %s1, %s405
          %s407 = smul.u32 4, %s27
        $region64: #{tpu_custom_call.1} parent=55 // pred_fallthru
          _
      $region56: #{tpu_custom_call.1} parent=5 // pred_fallthru
        _
      %p408 = scmp.le.s32.totalorder 1, %s27
      %p409 = scmp.lt.s32.totalorder %s27, 3
      %p410 = pnand %p408, %p409
      %p411 = pneg %p410
      // Predicated region
      $region65: #{tpu_custom_call.1} parent=5 // pred_check
        _
      $region66: #{tpu_custom_call.1} parent=5 // pred_check_branch
        %413 = sbr.rel (%p410) target = $region68
      $region67: #{tpu_custom_call.1} parent=5 // pred_region
        %s414 = ssub.s32 %s27, 1
        %s415 = smul.u32 4, %s32
        %p416 = scmp.lt.s32.totalorder %s415, 7
        %s417 = scalar_select %p416, %s415, 7
        %s418 = smul.addr %s417, 4
        %s419 = scalar_lea.vmem %s0, %s418
        %p420 = pneg %p53
        %p421 = pneg %p50
        %s422 = smul.u32 4, %s32
        %p423 = scmp.lt.s32.totalorder %s422, 7
        %s424 = scalar_select %p423, %s422, 7
        %s425 = smul.addr %s424, 8
        %s426 = scalar_lea.vmem %s1, %s425
        %p427 = pneg %p79
        %p428 = pneg %p76
        %p429 = pneg %p100
        %p430 = pneg %p97
        %p431 = pneg %p121
        %p432 = pneg %p118
        %p433 = pneg %p142
        %p434 = pneg %p139
        %p435 = pneg %p163
        %p436 = pneg %p160
        %p437 = pneg %p184
        %p438 = pneg %p181
        %p439 = pneg %p205
        %p440 = pneg %p202
        %p441 = pneg %p226
        %p442 = pneg %p223
        %p443 = pneg %p247
        %p444 = pneg %p244
        %p445 = pneg %p268
        %p446 = pneg %p265
        %p447 = pneg %p289
        %p448 = pneg %p286
        %p449 = pneg %p315
        %p450 = pneg %p312
        %s451 = sand.u32 %s302, 1
        %s452 = scalar_lea.sflag [#allocation5], %s451
        %s453 = sand.u32 %s302, 1
        %s454 = smul.addr %s453, 4
        %s455 = scalar_lea.vmem [#allocation4], %s454
        %p456 = pneg %p341
        %p457 = pneg %p338
        %p458 = scmp.lt.s32.totalorder %s32, 1
        %s459 = scalar_select %p458, %s32, 1
        %s460 = scalar_lea.vmem %s13, %s459
        %s461 = smul.u32 4, %s32
        %p462 = scmp.lt.s32.totalorder %s461, 7
        %s463 = scalar_select %p462, %s461, 7
        %s464 = smul.addr %s463, 4
        %s465 = scalar_lea.vmem %s0, %s464
        %s466 = smul.u32 4, %s32
        %s467 = smul.u32 4, %s32
        %p468 = scmp.lt.s32.totalorder %s467, 7
        %s469 = scalar_select %p468, %s467, 7
        %s470 = smul.addr %s469, 8
        %s471 = scalar_lea.vmem %s1, %s470
        %s472 = smul.u32 4, %s32
        %s473 = smul.u32 4, %s32
        %p474 = scmp.lt.s32.totalorder %s32, 1
        %s475 = scalar_select %p474, %s32, 1
        %s476 = scalar_lea.vmem %s13, %s475
        %v477 = vld [vmem:[%s2] sm:$0xff]
        %v478 = vld [vmem:[%s465] sm:$0x77]
        %v479 = vld [vmem:[%s465 + $0x8] sm:$0x77]
        %v480 = vld [vmem:[%s3] sm:$0xff]
        %482 = vset.pattern.permute.xlu0 0
        %483 = vperm.xlu0 %482, %v480
        %v484 = vpop.permute.xlu0 %483
        %v488 = vcombine.high %v478, %v478
        %v489 = vcombine.high %v479, %v479
        %vm490 = vcmask 23552
        %v492 = vsel %vm490, %v477, 0
        %vm494 = vcmask 1042432
        %v495 = vsel %vm494, %v478, 0
        %v497 = vsel %vm494, %v488, 0
        %v499 = vsel %vm494, %v479, 0
        %v501 = vsel %vm494, %v489, 0
        %503 = vmatprep.subr.mxu0 %v497
        %504 = vmatpush1.msra.mxu0 %v495
        %505 = vmatprep.subr.mxu0 0.0
        %506 = vmatpush1.msra.mxu0 0.0
        %507 = vmatprep.subr.mxu0 0.0
        %508 = vmatpush1.msra.mxu0 0.0
        %509 = vmatprep.subr.mxu0 0.0
        %510 = vmatpush1.msra.mxu0 0.0
        %511 = vmatprep.subr.mxu0 0.0
        %512 = vmatpush1.msra.mxu0 0.0
        %513 = vmatprep.subr.mxu0 0.0
        %514 = vmatpush1.msra.mxu0 0.0
        %515 = vmatprep.subr.mxu0 0.0
        %516 = vmatpush1.msra.mxu0 0.0
        %517 = vmatprep.subr.mxu0 0.0
        %518 = vmatpush1.msra.mxu0 0.0
        %519 = vmatprep.subr.mxu0 0.0
        %520 = vmatpush1.msra.mxu0 0.0
        %521 = vmatprep.subr.mxu0 0.0
        %522 = vmatpush1.msra.mxu0 0.0
        %523 = vmatprep.subr.mxu0 0.0
        %524 = vmatpush1.msra.mxu0 0.0
        %525 = vmatprep.subr.mxu0 0.0
        %526 = vmatpush1.msra.mxu0 0.0
        %527 = vmatprep.subr.mxu0 0.0
        %528 = vmatpush1.msra.mxu0 0.0
        %529 = vmatprep.subr.mxu0 0.0
        %530 = vmatpush1.msra.mxu0 0.0
        %531 = vmatprep.subr.mxu0 0.0
        %532 = vmatpush1.msra.mxu0 0.0
        %533 = vmatprep.subr.mxu0 0.0
        %534 = vmatpush1.msra.mxu0 0.0
        %535 = vmatprep.subr.mxu0 0.0
        %536 = vmatpush1.msra.mxu0 0.0
        %537 = vmatprep.subr.mxu0 0.0
        %538 = vmatpush1.msra.mxu0 0.0
        %539 = vmatprep.subr.mxu0 0.0
        %540 = vmatpush1.msra.mxu0 0.0
        %541 = vmatprep.subr.mxu0 0.0
        %542 = vmatpush1.msra.mxu0 0.0
        %543 = vmatprep.subr.mxu0 0.0
        %544 = vmatpush1.msra.mxu0 0.0
        %545 = vmatprep.subr.mxu0 0.0
        %546 = vmatpush1.msra.mxu0 0.0
        %547 = vmatprep.subr.mxu0 0.0
        %548 = vmatpush1.msra.mxu0 0.0
        %549 = vmatprep.subr.mxu0 0.0
        %550 = vmatpush1.msra.mxu0 0.0
        %551 = vmatprep.subr.mxu0 0.0
        %552 = vmatpush1.msra.mxu0 0.0
        %553 = vmatprep.subr.mxu0 0.0
        %554 = vmatpush1.msra.mxu0 0.0
        %555 = vmatprep.subr.mxu0 0.0
        %556 = vmatpush1.msra.mxu0 0.0
        %557 = vmatprep.subr.mxu0 0.0
        %558 = vmatpush1.msra.mxu0 0.0
        %559 = vmatprep.subr.mxu0 0.0
        %560 = vmatpush1.msra.mxu0 0.0
        %561 = vmatprep.subr.mxu0 0.0
        %562 = vmatpush1.msra.mxu0 0.0
        %563 = vmatprep.subr.mxu0 0.0
        %564 = vmatpush1.msra.mxu0 0.0
        %565 = vmatprep.subr.mxu0 0.0
        %566 = vmatpush1.msra.mxu0 0.0
        %567 = vmatprep.mubr.f32.mxu0 0.0
        %568 = vmatmul.mubr.f32.gmra.mrb[0].mxu0 %v492
        %v569 = vpop.f32.mrb[0].mxu0
        %v570 = vadd.f32 %v484, %v569
        %v571 = vpop.f32.mrb[0].mxu0
        %v572 = vadd.f32 %v484, %v571
        %573 = vdwg.mxu0
        %574 = vmatprep.subr.mxu0 %v501
        %575 = vmatpush1.msra.mxu0 %v499
        %576 = vmatprep.subr.mxu0 0.0
        %577 = vmatpush1.msra.mxu0 0.0
        %578 = vmatprep.subr.mxu0 0.0
        %579 = vmatpush1.msra.mxu0 0.0
        %580 = vmatprep.subr.mxu0 0.0
        %581 = vmatpush1.msra.mxu0 0.0
        %582 = vmatprep.subr.mxu0 0.0
        %583 = vmatpush1.msra.mxu0 0.0
        %584 = vmatprep.subr.mxu0 0.0
        %585 = vmatpush1.msra.mxu0 0.0
        %586 = vmatprep.subr.mxu0 0.0
        %587 = vmatpush1.msra.mxu0 0.0
        %588 = vmatprep.subr.mxu0 0.0
        %589 = vmatpush1.msra.mxu0 0.0
        %590 = vmatprep.subr.mxu0 0.0
        %591 = vmatpush1.msra.mxu0 0.0
        %592 = vmatprep.subr.mxu0 0.0
        %593 = vmatpush1.msra.mxu0 0.0
        %594 = vmatprep.subr.mxu0 0.0
        %595 = vmatpush1.msra.mxu0 0.0
        %596 = vmatprep.subr.mxu0 0.0
        %597 = vmatpush1.msra.mxu0 0.0
        %598 = vmatprep.subr.mxu0 0.0
        %599 = vmatpush1.msra.mxu0 0.0
        %600 = vmatprep.subr.mxu0 0.0
        %601 = vmatpush1.msra.mxu0 0.0
        %602 = vmatprep.subr.mxu0 0.0
        %603 = vmatpush1.msra.mxu0 0.0
        %604 = vmatprep.subr.mxu0 0.0
        %605 = vmatpush1.msra.mxu0 0.0
        %606 = vmatprep.subr.mxu0 0.0
        %607 = vmatpush1.msra.mxu0 0.0
        %608 = vmatprep.subr.mxu0 0.0
        %609 = vmatpush1.msra.mxu0 0.0
        %610 = vmatprep.subr.mxu0 0.0
        %611 = vmatpush1.msra.mxu0 0.0
        %612 = vmatprep.subr.mxu0 0.0
        %613 = vmatpush1.msra.mxu0 0.0
        %614 = vmatprep.subr.mxu0 0.0
        %615 = vmatpush1.msra.mxu0 0.0
        %616 = vmatprep.subr.mxu0 0.0
        %617 = vmatpush1.msra.mxu0 0.0
        %618 = vmatprep.subr.mxu0 0.0
        %619 = vmatpush1.msra.mxu0 0.0
        %620 = vmatprep.subr.mxu0 0.0
        %621 = vmatpush1.msra.mxu0 0.0
        %622 = vmatprep.subr.mxu0 0.0
        %623 = vmatpush1.msra.mxu0 0.0
        %624 = vmatprep.subr.mxu0 0.0
        %625 = vmatpush1.msra.mxu0 0.0
        %626 = vmatprep.subr.mxu0 0.0
        %627 = vmatpush1.msra.mxu0 0.0
        %628 = vmatprep.subr.mxu0 0.0
        %629 = vmatpush1.msra.mxu0 0.0
        %630 = vmatprep.subr.mxu0 0.0
        %631 = vmatpush1.msra.mxu0 0.0
        %632 = vmatprep.subr.mxu0 0.0
        %633 = vmatpush1.msra.mxu0 0.0
        %634 = vmatprep.subr.mxu0 0.0
        %635 = vmatpush1.msra.mxu0 0.0
        %636 = vmatprep.subr.mxu0 0.0
        %637 = vmatpush1.msra.mxu0 0.0
        %638 = vmatprep.mubr.f32.mxu0 0.0
        %639 = vmatmul.mubr.f32.gmra.mrb[0].mxu0 %v492
        %v640 = vpop.f32.mrb[0].mxu0
        %v641 = vadd.f32 %v484, %v640
        %v642 = vpop.f32.mrb[0].mxu0
        %v643 = vadd.f32 %v484, %v642
        %644 = vdwg.mxu0
        %v645 = vmul.f32 %v570, 0.01
        %v646 = vmul.f32 %v572, 0.01
        %v647 = vmul.f32 %v641, 0.01
        %v648 = vmul.f32 %v643, 0.01
        %v649 = vmax.f32 %v570, %v645
        %v650 = vmax.f32 %v572, %v646
        %v651 = vmax.f32 %v641, %v647
        %v652 = vmax.f32 %v643, %v648
        %v653 = vld [vmem:[%s4] sm:$0xff]
        %v654 = vld [vmem:[%s4 + $0x8] sm:$0xff]
        %v655 = vld [vmem:[%s4 + $0x10] sm:$0xff]
        %v656 = vld [vmem:[%s4 + $0x18] sm:$0xff]
        %v657 = vld [vmem:[%s4 + $0x20] sm:$0xff]
        %v658 = vld [vmem:[%s4 + $0x28] sm:$0xff]
        %v659 = vld [vmem:[%s5] sm:$0xff]
        %v660 = vld [vmem:[%s5 + $0x8] sm:$0xff]
        %v661 = vld [vmem:[%s5 + $0x10] sm:$0xff]
        %v662 = vld [vmem:[%s5 + $0x18] sm:$0xff]
        %v663 = vld [vmem:[%s5 + $0x20] sm:$0xff]
        %v664 = vld [vmem:[%s5 + $0x28] sm:$0xff]
        %666 = vset.pattern.permute.xlu0 0
        %667 = vperm.xlu0 %666, %v659
        %v668 = vpop.permute.xlu0 %667
        %671 = vset.pattern.permute.xlu0 0
        %672 = vperm.xlu0 %671, %v660
        %v673 = vpop.permute.xlu0 %672
        %676 = vset.pattern.permute.xlu0 0
        %677 = vperm.xlu0 %676, %v661
        %v678 = vpop.permute.xlu0 %677
        %681 = vset.pattern.permute.xlu0 0
        %682 = vperm.xlu0 %681, %v662
        %v683 = vpop.permute.xlu0 %682
        %686 = vset.pattern.permute.xlu0 0
        %687 = vperm.xlu0 %686, %v663
        %v688 = vpop.permute.xlu0 %687
        %691 = vset.pattern.permute.xlu0 0
        %692 = vperm.xlu0 %691, %v664
        %v693 = vpop.permute.xlu0 %692
        %vm695 = vcmask 64512
        %v697 = vsel %vm695, %v653, 0
        %v700 = vsel %vm695, %v654, 0
        %v703 = vsel %vm695, %v655, 0
        %v706 = vsel %vm695, %v656, 0
        %v709 = vsel %vm695, %v657, 0
        %v712 = vsel %vm695, %v658, 0
        %714 = vmatprep.subr.mxu0 %v650
        %715 = vmatpush1.msra.mxu0 %v649
        %716 = vmatprep.subr.mxu0 0.0
        %717 = vmatpush1.msra.mxu0 0.0
        %718 = vmatprep.subr.mxu0 0.0
        %719 = vmatpush1.msra.mxu0 0.0
        %720 = vmatprep.subr.mxu0 0.0
        %721 = vmatpush1.msra.mxu0 0.0
        %722 = vmatprep.subr.mxu0 0.0
        %723 = vmatpush1.msra.mxu0 0.0
        %724 = vmatprep.subr.mxu0 0.0
        %725 = vmatpush1.msra.mxu0 0.0
        %726 = vmatprep.subr.mxu0 0.0
        %727 = vmatpush1.msra.mxu0 0.0
        %728 = vmatprep.subr.mxu0 0.0
        %729 = vmatpush1.msra.mxu0 0.0
        %730 = vmatprep.subr.mxu0 0.0
        %731 = vmatpush1.msra.mxu0 0.0
        %732 = vmatprep.subr.mxu0 0.0
        %733 = vmatpush1.msra.mxu0 0.0
        %734 = vmatprep.subr.mxu0 0.0
        %735 = vmatpush1.msra.mxu0 0.0
        %736 = vmatprep.subr.mxu0 0.0
        %737 = vmatpush1.msra.mxu0 0.0
        %738 = vmatprep.subr.mxu0 0.0
        %739 = vmatpush1.msra.mxu0 0.0
        %740 = vmatprep.subr.mxu0 0.0
        %741 = vmatpush1.msra.mxu0 0.0
        %742 = vmatprep.subr.mxu0 0.0
        %743 = vmatpush1.msra.mxu0 0.0
        %744 = vmatprep.subr.mxu0 0.0
        %745 = vmatpush1.msra.mxu0 0.0
        %746 = vmatprep.subr.mxu0 0.0
        %747 = vmatpush1.msra.mxu0 0.0
        %748 = vmatprep.subr.mxu0 0.0
        %749 = vmatpush1.msra.mxu0 0.0
        %750 = vmatprep.subr.mxu0 0.0
        %751 = vmatpush1.msra.mxu0 0.0
        %752 = vmatprep.subr.mxu0 0.0
        %753 = vmatpush1.msra.mxu0 0.0
        %754 = vmatprep.subr.mxu0 0.0
        %755 = vmatpush1.msra.mxu0 0.0
        %756 = vmatprep.subr.mxu0 0.0
        %757 = vmatpush1.msra.mxu0 0.0
        %758 = vmatprep.subr.mxu0 0.0
        %759 = vmatpush1.msra.mxu0 0.0
        %760 = vmatprep.subr.mxu0 0.0
        %761 = vmatpush1.msra.mxu0 0.0
        %762 = vmatprep.subr.mxu0 0.0
        %763 = vmatpush1.msra.mxu0 0.0
        %764 = vmatprep.subr.mxu0 0.0
        %765 = vmatpush1.msra.mxu0 0.0
        %766 = vmatprep.subr.mxu0 0.0
        %767 = vmatpush1.msra.mxu0 0.0
        %768 = vmatprep.subr.mxu0 0.0
        %769 = vmatpush1.msra.mxu0 0.0
        %770 = vmatprep.subr.mxu0 0.0
        %771 = vmatpush1.msra.mxu0 0.0
        %772 = vmatprep.subr.mxu0 0.0
        %773 = vmatpush1.msra.mxu0 0.0
        %774 = vmatprep.subr.mxu0 0.0
        %775 = vmatpush1.msra.mxu0 0.0
        %776 = vmatprep.subr.mxu0 0.0
        %777 = vmatpush1.msra.mxu0 0.0
        %778 = vmatprep.mubr.f32.mxu0 0.0
        %779 = vmatmul.mubr.f32.gmra.mrb[0].mxu0 %v697
        %v780 = vpop.f32.mrb[0].mxu0
        %v781 = vadd.f32 %v668, %v780
        %v782 = vpop.f32.mrb[0].mxu0
        %v783 = vadd.f32 %v668, %v782
        %784 = vmatprep.mubr.f32.mxu0 0.0
        %785 = vmatmul.mubr.f32.gmra.mrb[0].mxu0 %v700
        %v786 = vpop.f32.mrb[0].mxu0
        %v787 = vadd.f32 %v673, %v786
        %v788 = vpop.f32.mrb[0].mxu0
        %v789 = vadd.f32 %v673, %v788
        %790 = vmatprep.mubr.f32.mxu0 0.0
        %791 = vmatmul.mubr.f32.gmra.mrb[0].mxu0 %v703
        %v792 = vpop.f32.mrb[0].mxu0
        %v793 = vadd.f32 %v678, %v792
        %v794 = vpop.f32.mrb[0].mxu0
        %v795 = vadd.f32 %v678, %v794
        %796 = vmatprep.mubr.f32.mxu0 0.0
        %797 = vmatmul.mubr.f32.gmra.mrb[0].mxu0 %v706
        %v798 = vpop.f32.mrb[0].mxu0
        %v799 = vadd.f32 %v683, %v798
        %v800 = vpop.f32.mrb[0].mxu0
        %v801 = vadd.f32 %v683, %v800
        %802 = vmatprep.mubr.f32.mxu0 0.0
        %803 = vmatmul.mubr.f32.gmra.mrb[0].mxu0 %v709
        %v804 = vpop.f32.mrb[0].mxu0
        %v805 = vadd.f32 %v688, %v804
        %v806 = vpop.f32.mrb[0].mxu0
        %v807 = vadd.f32 %v688, %v806
        %808 = vmatprep.mubr.f32.mxu0 0.0
        %809 = vmatmul.mubr.f32.gmra.mrb[0].mxu0 %v712
        %v810 = vpop.f32.mrb[0].mxu0
        %v811 = vadd.f32 %v693, %v810
        %v812 = vpop.f32.mrb[0].mxu0
        %v813 = vadd.f32 %v693, %v812
        %814 = vdwg.mxu0
        %815 = vmatprep.subr.mxu0 %v652
        %816 = vmatpush1.msra.mxu0 %v651
        %817 = vmatprep.subr.mxu0 0.0
        %818 = vmatpush1.msra.mxu0 0.0
        %819 = vmatprep.subr.mxu0 0.0
        %820 = vmatpush1.msra.mxu0 0.0
        %821 = vmatprep.subr.mxu0 0.0
        %822 = vmatpush1.msra.mxu0 0.0
        %823 = vmatprep.subr.mxu0 0.0
        %824 = vmatpush1.msra.mxu0 0.0
        %825 = vmatprep.subr.mxu0 0.0
        %826 = vmatpush1.msra.mxu0 0.0
        %827 = vmatprep.subr.mxu0 0.0
        %828 = vmatpush1.msra.mxu0 0.0
        %829 = vmatprep.subr.mxu0 0.0
        %830 = vmatpush1.msra.mxu0 0.0
        %831 = vmatprep.subr.mxu0 0.0
        %832 = vmatpush1.msra.mxu0 0.0
        %833 = vmatprep.subr.mxu0 0.0
        %834 = vmatpush1.msra.mxu0 0.0
        %835 = vmatprep.subr.mxu0 0.0
        %836 = vmatpush1.msra.mxu0 0.0
        %837 = vmatprep.subr.mxu0 0.0
        %838 = vmatpush1.msra.mxu0 0.0
        %839 = vmatprep.subr.mxu0 0.0
        %840 = vmatpush1.msra.mxu0 0.0
        %841 = vmatprep.subr.mxu0 0.0
        %842 = vmatpush1.msra.mxu0 0.0
        %843 = vmatprep.subr.mxu0 0.0
        %844 = vmatpush1.msra.mxu0 0.0
        %845 = vmatprep.subr.mxu0 0.0
        %846 = vmatpush1.msra.mxu0 0.0
        %847 = vmatprep.subr.mxu0 0.0
        %848 = vmatpush1.msra.mxu0 0.0
        %849 = vmatprep.subr.mxu0 0.0
        %850 = vmatpush1.msra.mxu0 0.0
        %851 = vmatprep.subr.mxu0 0.0
        %852 = vmatpush1.msra.mxu0 0.0
        %853 = vmatprep.subr.mxu0 0.0
        %854 = vmatpush1.msra.mxu0 0.0
        %855 = vmatprep.subr.mxu0 0.0
        %856 = vmatpush1.msra.mxu0 0.0
        %857 = vmatprep.subr.mxu0 0.0
        %858 = vmatpush1.msra.mxu0 0.0
        %859 = vmatprep.subr.mxu0 0.0
        %860 = vmatpush1.msra.mxu0 0.0
        %861 = vmatprep.subr.mxu0 0.0
        %862 = vmatpush1.msra.mxu0 0.0
        %863 = vmatprep.subr.mxu0 0.0
        %864 = vmatpush1.msra.mxu0 0.0
        %865 = vmatprep.subr.mxu0 0.0
        %866 = vmatpush1.msra.mxu0 0.0
        %867 = vmatprep.subr.mxu0 0.0
        %868 = vmatpush1.msra.mxu0 0.0
        %869 = vmatprep.subr.mxu0 0.0
        %870 = vmatpush1.msra.mxu0 0.0
        %871 = vmatprep.subr.mxu0 0.0
        %872 = vmatpush1.msra.mxu0 0.0
        %873 = vmatprep.subr.mxu0 0.0
        %874 = vmatpush1.msra.mxu0 0.0
        %875 = vmatprep.subr.mxu0 0.0
        %876 = vmatpush1.msra.mxu0 0.0
        %877 = vmatprep.subr.mxu0 0.0
        %878 = vmatpush1.msra.mxu0 0.0
        %879 = vmatprep.mubr.f32.mxu0 0.0
        %880 = vmatmul.mubr.f32.gmra.mrb[0].mxu0 %v697
        %v881 = vpop.f32.mrb[0].mxu0
        %v882 = vadd.f32 %v668, %v881
        %v883 = vpop.f32.mrb[0].mxu0
        %v884 = vadd.f32 %v668, %v883
        %885 = vmatprep.mubr.f32.mxu0 0.0
        %886 = vmatmul.mubr.f32.gmra.mrb[0].mxu0 %v700
        %v887 = vpop.f32.mrb[0].mxu0
        %v888 = vadd.f32 %v673, %v887
        %v889 = vpop.f32.mrb[0].mxu0
        %v890 = vadd.f32 %v673, %v889
        %891 = vmatprep.mubr.f32.mxu0 0.0
        %892 = vmatmul.mubr.f32.gmra.mrb[0].mxu0 %v703
        %v893 = vpop.f32.mrb[0].mxu0
        %v894 = vadd.f32 %v678, %v893
        %v895 = vpop.f32.mrb[0].mxu0
        %v896 = vadd.f32 %v678, %v895
        %897 = vmatprep.mubr.f32.mxu0 0.0
        %898 = vmatmul.mubr.f32.gmra.mrb[0].mxu0 %v706
        %v899 = vpop.f32.mrb[0].mxu0
        %v900 = vadd.f32 %v683, %v899
        %v901 = vpop.f32.mrb[0].mxu0
        %v902 = vadd.f32 %v683, %v901
        %903 = vmatprep.mubr.f32.mxu0 0.0
        %904 = vmatmul.mubr.f32.gmra.mrb[0].mxu0 %v709
        %v905 = vpop.f32.mrb[0].mxu0
        %v906 = vadd.f32 %v688, %v905
        %v907 = vpop.f32.mrb[0].mxu0
        %v908 = vadd.f32 %v688, %v907
        %909 = vmatprep.mubr.f32.mxu0 0.0
        %910 = vmatmul.mubr.f32.gmra.mrb[0].mxu0 %v712
        %v911 = vpop.f32.mrb[0].mxu0
        %v912 = vadd.f32 %v693, %v911
        %v913 = vpop.f32.mrb[0].mxu0
        %v914 = vadd.f32 %v693, %v913
        %915 = vdwg.mxu0
        %v916 = vmax.f32 %v781, %v799
        %v917 = vmax.f32 %v783, %v801
        %v918 = vmax.f32 %v882, %v900
        %v919 = vmax.f32 %v884, %v902
        %v920 = vmax.f32 %v787, %v805
        %v921 = vmax.f32 %v789, %v807
        %v922 = vmax.f32 %v888, %v906
        %v923 = vmax.f32 %v890, %v908
        %v924 = vmax.f32 %v793, %v811
        %v925 = vmax.f32 %v795, %v813
        %v926 = vmax.f32 %v894, %v912
        %v927 = vmax.f32 %v896, %v914
        %v928 = vmul.f32 %v916, 0.01
        %v929 = vmul.f32 %v917, 0.01
        %v930 = vmul.f32 %v918, 0.01
        %v931 = vmul.f32 %v919, 0.01
        %v932 = vmul.f32 %v920, 0.01
        %v933 = vmul.f32 %v921, 0.01
        %v934 = vmul.f32 %v922, 0.01
        %v935 = vmul.f32 %v923, 0.01
        %v936 = vmul.f32 %v924, 0.01
        %v937 = vmul.f32 %v925, 0.01
        %v938 = vmul.f32 %v926, 0.01
        %v939 = vmul.f32 %v927, 0.01
        %v940 = vmax.f32 %v916, %v928
        %v941 = vmax.f32 %v917, %v929
        %v942 = vmax.f32 %v918, %v930
        %v943 = vmax.f32 %v919, %v931
        %v944 = vmax.f32 %v920, %v932
        %v945 = vmax.f32 %v921, %v933
        %v946 = vmax.f32 %v922, %v934
        %v947 = vmax.f32 %v923, %v935
        %v948 = vmax.f32 %v924, %v936
        %v949 = vmax.f32 %v925, %v937
        %v950 = vmax.f32 %v926, %v938
        %v951 = vmax.f32 %v927, %v939
        %v952 = vld [vmem:[%s6] sm:$0xff]
        %v953 = vld [vmem:[%s6 + $0x8] sm:$0xff]
        %v954 = vld [vmem:[%s7] sm:$0xff]
        %v955 = vld [vmem:[%s7 + $0x8] sm:$0xff]
        %957 = vset.pattern.permute.xlu0 0
        %958 = vperm.xlu0 %957, %v954
        %v959 = vpop.permute.xlu0 %958
        %962 = vset.pattern.permute.xlu0 0
        %963 = vperm.xlu0 %962, %v955
        %v964 = vpop.permute.xlu0 %963
        %vm966 = vcmask 195584
        %v968 = vsel %vm966, %v952, 0
        %v971 = vsel %vm966, %v953, 0
        %973 = vmatprep.subr.mxu0 %v941
        %974 = vmatpush1.msra.mxu0 %v940
        %975 = vmatprep.subr.mxu0 %v945
        %976 = vmatpush1.msra.mxu0 %v944
        %977 = vmatprep.subr.mxu0 %v949
        %978 = vmatpush1.msra.mxu0 %v948
        %979 = vmatprep.subr.mxu0 0.0
        %980 = vmatpush1.msra.mxu0 0.0
        %981 = vmatprep.subr.mxu0 0.0
        %982 = vmatpush1.msra.mxu0 0.0
        %983 = vmatprep.subr.mxu0 0.0
        %984 = vmatpush1.msra.mxu0 0.0
        %985 = vmatprep.subr.mxu0 0.0
        %986 = vmatpush1.msra.mxu0 0.0
        %987 = vmatprep.subr.mxu0 0.0
        %988 = vmatpush1.msra.mxu0 0.0
        %989 = vmatprep.subr.mxu0 0.0
        %990 = vmatpush1.msra.mxu0 0.0
        %991 = vmatprep.subr.mxu0 0.0
        %992 = vmatpush1.msra.mxu0 0.0
        %993 = vmatprep.subr.mxu0 0.0
        %994 = vmatpush1.msra.mxu0 0.0
        %995 = vmatprep.subr.mxu0 0.0
        %996 = vmatpush1.msra.mxu0 0.0
        %997 = vmatprep.subr.mxu0 0.0
        %998 = vmatpush1.msra.mxu0 0.0
        %999 = vmatprep.subr.mxu0 0.0
        %1000 = vmatpush1.msra.mxu0 0.0
        %1001 = vmatprep.subr.mxu0 0.0
        %1002 = vmatpush1.msra.mxu0 0.0
        %1003 = vmatprep.subr.mxu0 0.0
        %1004 = vmatpush1.msra.mxu0 0.0
        %1005 = vmatprep.subr.mxu0 0.0
        %1006 = vmatpush1.msra.mxu0 0.0
        %1007 = vmatprep.subr.mxu0 0.0
        %1008 = vmatpush1.msra.mxu0 0.0
        %1009 = vmatprep.subr.mxu0 0.0
        %1010 = vmatpush1.msra.mxu0 0.0
        %1011 = vmatprep.subr.mxu0 0.0
        %1012 = vmatpush1.msra.mxu0 0.0
        %1013 = vmatprep.subr.mxu0 0.0
        %1014 = vmatpush1.msra.mxu0 0.0
        %1015 = vmatprep.subr.mxu0 0.0
        %1016 = vmatpush1.msra.mxu0 0.0
        %1017 = vmatprep.subr.mxu0 0.0
        %1018 = vmatpush1.msra.mxu0 0.0
        %1019 = vmatprep.subr.mxu0 0.0
        %1020 = vmatpush1.msra.mxu0 0.0
        %1021 = vmatprep.subr.mxu0 0.0
        %1022 = vmatpush1.msra.mxu0 0.0
        %1023 = vmatprep.subr.mxu0 0.0
        %1024 = vmatpush1.msra.mxu0 0.0
        %1025 = vmatprep.subr.mxu0 0.0
        %1026 = vmatpush1.msra.mxu0 0.0
        %1027 = vmatprep.subr.mxu0 0.0
        %1028 = vmatpush1.msra.mxu0 0.0
        %1029 = vmatprep.subr.mxu0 0.0
        %1030 = vmatpush1.msra.mxu0 0.0
        %1031 = vmatprep.subr.mxu0 0.0
        %1032 = vmatpush1.msra.mxu0 0.0
        %1033 = vmatprep.subr.mxu0 0.0
        %1034 = vmatpush1.msra.mxu0 0.0
        %1035 = vmatprep.subr.mxu0 0.0
        %1036 = vmatpush1.msra.mxu0 0.0
        %1037 = vmatprep.mubr.f32.mxu0 0.0
        %1038 = vmatmul.mubr.f32.gmra.mrb[0].mxu0 %v968
        %v1039 = vpop.f32.mrb[0].mxu0
        %v1040 = vadd.f32 %v959, %v1039
        %v1041 = vpop.f32.mrb[0].mxu0
        %v1042 = vadd.f32 %v959, %v1041
        %1043 = vmatprep.mubr.f32.mxu0 0.0
        %1044 = vmatmul.mubr.f32.gmra.mrb[0].mxu0 %v971
        %v1045 = vpop.f32.mrb[0].mxu0
        %v1046 = vadd.f32 %v964, %v1045
        %v1047 = vpop.f32.mrb[0].mxu0
        %v1048 = vadd.f32 %v964, %v1047
        %1049 = vdwg.mxu0
        %1050 = vmatprep.subr.mxu0 %v943
        %1051 = vmatpush1.msra.mxu0 %v942
        %1052 = vmatprep.subr.mxu0 %v947
        %1053 = vmatpush1.msra.mxu0 %v946
        %1054 = vmatprep.subr.mxu0 %v951
        %1055 = vmatpush1.msra.mxu0 %v950
        %1056 = vmatprep.subr.mxu0 0.0
        %1057 = vmatpush1.msra.mxu0 0.0
        %1058 = vmatprep.subr.mxu0 0.0
        %1059 = vmatpush1.msra.mxu0 0.0
        %1060 = vmatprep.subr.mxu0 0.0
        %1061 = vmatpush1.msra.mxu0 0.0
        %1062 = vmatprep.subr.mxu0 0.0
        %1063 = vmatpush1.msra.mxu0 0.0
        %1064 = vmatprep.subr.mxu0 0.0
        %1065 = vmatpush1.msra.mxu0 0.0
        %1066 = vmatprep.subr.mxu0 0.0
        %1067 = vmatpush1.msra.mxu0 0.0
        %1068 = vmatprep.subr.mxu0 0.0
        %1069 = vmatpush1.msra.mxu0 0.0
        %1070 = vmatprep.subr.mxu0 0.0
        %1071 = vmatpush1.msra.mxu0 0.0
        %1072 = vmatprep.subr.mxu0 0.0
        %1073 = vmatpush1.msra.mxu0 0.0
        %1074 = vmatprep.subr.mxu0 0.0
        %1075 = vmatpush1.msra.mxu0 0.0
        %1076 = vmatprep.subr.mxu0 0.0
        %1077 = vmatpush1.msra.mxu0 0.0
        %1078 = vmatprep.subr.mxu0 0.0
        %1079 = vmatpush1.msra.mxu0 0.0
        %1080 = vmatprep.subr.mxu0 0.0
        %1081 = vmatpush1.msra.mxu0 0.0
        %1082 = vmatprep.subr.mxu0 0.0
        %1083 = vmatpush1.msra.mxu0 0.0
        %1084 = vmatprep.subr.mxu0 0.0
        %1085 = vmatpush1.msra.mxu0 0.0
        %1086 = vmatprep.subr.mxu0 0.0
        %1087 = vmatpush1.msra.mxu0 0.0
        %1088 = vmatprep.subr.mxu0 0.0
        %1089 = vmatpush1.msra.mxu0 0.0
        %1090 = vmatprep.subr.mxu0 0.0
        %1091 = vmatpush1.msra.mxu0 0.0
        %1092 = vmatprep.subr.mxu0 0.0
        %1093 = vmatpush1.msra.mxu0 0.0
        %1094 = vmatprep.subr.mxu0 0.0
        %1095 = vmatpush1.msra.mxu0 0.0
        %1096 = vmatprep.subr.mxu0 0.0
        %1097 = vmatpush1.msra.mxu0 0.0
        %1098 = vmatprep.subr.mxu0 0.0
        %1099 = vmatpush1.msra.mxu0 0.0
        %1100 = vmatprep.subr.mxu0 0.0
        %1101 = vmatpush1.msra.mxu0 0.0
        %1102 = vmatprep.subr.mxu0 0.0
        %1103 = vmatpush1.msra.mxu0 0.0
        %1104 = vmatprep.subr.mxu0 0.0
        %1105 = vmatpush1.msra.mxu0 0.0
        %1106 = vmatprep.subr.mxu0 0.0
        %1107 = vmatpush1.msra.mxu0 0.0
        %1108 = vmatprep.subr.mxu0 0.0
        %1109 = vmatpush1.msra.mxu0 0.0
        %1110 = vmatprep.subr.mxu0 0.0
        %1111 = vmatpush1.msra.mxu0 0.0
        %1112 = vmatprep.subr.mxu0 0.0
        %1113 = vmatpush1.msra.mxu0 0.0
        %1114 = vmatprep.mubr.f32.mxu0 0.0
        %1115 = vmatmul.mubr.f32.gmra.mrb[0].mxu0 %v968
        %v1116 = vpop.f32.mrb[0].mxu0
        %v1117 = vadd.f32 %v959, %v1116
        %v1118 = vpop.f32.mrb[0].mxu0
        %v1119 = vadd.f32 %v959, %v1118
        %1120 = vmatprep.mubr.f32.mxu0 0.0
        %1121 = vmatmul.mubr.f32.gmra.mrb[0].mxu0 %v971
        %v1122 = vpop.f32.mrb[0].mxu0
        %v1123 = vadd.f32 %v964, %v1122
        %v1124 = vpop.f32.mrb[0].mxu0
        %v1125 = vadd.f32 %v964, %v1124
        %1126 = vdwg.mxu0
        %vm1127 = vcmp.gt.f32.partialorder %v1040, 0.0
        %vm1128 = vcmp.gt.f32.partialorder %v1042, 0.0
        %vm1129 = vcmp.gt.f32.partialorder %v1117, 0.0
        %vm1130 = vcmp.gt.f32.partialorder %v1119, 0.0
        %vm1131 = vcmp.gt.f32.partialorder %v1046, 0.0
        %vm1132 = vcmp.gt.f32.partialorder %v1048, 0.0
        %vm1133 = vcmp.gt.f32.partialorder %v1123, 0.0
        %vm1134 = vcmp.gt.f32.partialorder %v1125, 0.0
        %v1135 = vmul.f32 %v1040, 1.442695
        %v1136 = vpow.pop %v1135
        %v1137 = vmul.f32 %v1042, 1.442695
        %v1138 = vpow.pop %v1137
        %v1139 = vmul.f32 %v1117, 1.442695
        %v1140 = vpow.pop %v1139
        %v1141 = vmul.f32 %v1119, 1.442695
        %v1142 = vpow.pop %v1141
        %v1143 = vmul.f32 %v1046, 1.442695
        %v1144 = vpow.pop %v1143
        %v1145 = vmul.f32 %v1048, 1.442695
        %v1146 = vpow.pop %v1145
        %v1147 = vmul.f32 %v1123, 1.442695
        %v1148 = vpow.pop %v1147
        %v1149 = vmul.f32 %v1125, 1.442695
        %v1150 = vpow.pop %v1149
        %v1151 = vsub.f32 %v1136, 1.0
        %v1152 = vsub.f32 %v1138, 1.0
        %v1153 = vsub.f32 %v1140, 1.0
        %v1154 = vsub.f32 %v1142, 1.0
        %v1155 = vsub.f32 %v1144, 1.0
        %v1156 = vsub.f32 %v1146, 1.0
        %v1157 = vsub.f32 %v1148, 1.0
        %v1158 = vsub.f32 %v1150, 1.0
        %v1159 = vsel %vm1127, %v1040, %v1151
        %v1160 = vsel %vm1128, %v1042, %v1152
        %v1161 = vsel %vm1129, %v1117, %v1153
        %v1162 = vsel %vm1130, %v1119, %v1154
        %v1163 = vsel %vm1131, %v1046, %v1155
        %v1164 = vsel %vm1132, %v1048, %v1156
        %v1165 = vsel %vm1133, %v1123, %v1157
        %v1166 = vsel %vm1134, %v1125, %v1158
        %v1167 = vld [vmem:[%s471] sm:$0xff]
        %v1168 = vld [vmem:[%s471 + $0x8] sm:$0xff]
        %v1169 = vld [vmem:[%s471 + $0x10] sm:$0xff]
        %v1170 = vld [vmem:[%s471 + $0x18] sm:$0xff]
        %v1171 = vmul.f32 %v1163, %v1167
        %v1172 = vmul.f32 %v1164, %v1168
        %v1173 = vmul.f32 %v1165, %v1169
        %v1174 = vmul.f32 %v1166, %v1170
        %v1175 = vadd.f32 %v1159, %v1171
        %v1176 = vadd.f32 %v1160, %v1172
        %v1177 = vadd.f32 %v1161, %v1173
        %v1178 = vadd.f32 %v1162, %v1174
        %v1179 = vld [vmem:[%s8] sm:$0xff]
        %v1180 = vld [vmem:[%s8 + $0x8] sm:$0xff]
        %v1181 = vld [vmem:[%s8 + $0x10] sm:$0xff]
        %v1182 = vld [vmem:[#allocation2] sm:$0x1]
        %v1184 = vlaneseq
        %v1185 = vshrl.u32 %v1184, 7
        %v1186 = vsub.s32 0, %v1185
        %v1187 = vrot.slane %v1182, %v1186
        %1188 = vset.pattern.permute.xlu0 0
        %1189 = vperm.xlu0 %1188, %v1187
        %v1190 = vpop.permute.xlu0 %1189
        %v1193 = vsel %vm695, %v1179, 0
        %v1196 = vsel %vm695, %v1180, 0
        %v1199 = vsel %vm695, %v1181, 0
        %1201 = vmatprep.subr.mxu0 %v1176
        %1202 = vmatpush1.msra.mxu0 %v1175
        %1203 = vmatprep.subr.mxu0 0.0
        %1204 = vmatpush1.msra.mxu0 0.0
        %1205 = vmatprep.subr.mxu0 0.0
        %1206 = vmatpush1.msra.mxu0 0.0
        %1207 = vmatprep.subr.mxu0 0.0
        %1208 = vmatpush1.msra.mxu0 0.0
        %1209 = vmatprep.subr.mxu0 0.0
        %1210 = vmatpush1.msra.mxu0 0.0
        %1211 = vmatprep.subr.mxu0 0.0
        %1212 = vmatpush1.msra.mxu0 0.0
        %1213 = vmatprep.subr.mxu0 0.0
        %1214 = vmatpush1.msra.mxu0 0.0
        %1215 = vmatprep.subr.mxu0 0.0
        %1216 = vmatpush1.msra.mxu0 0.0
        %1217 = vmatprep.subr.mxu0 0.0
        %1218 = vmatpush1.msra.mxu0 0.0
        %1219 = vmatprep.subr.mxu0 0.0
        %1220 = vmatpush1.msra.mxu0 0.0
        %1221 = vmatprep.subr.mxu0 0.0
        %1222 = vmatpush1.msra.mxu0 0.0
        %1223 = vmatprep.subr.mxu0 0.0
        %1224 = vmatpush1.msra.mxu0 0.0
        %1225 = vmatprep.subr.mxu0 0.0
        %1226 = vmatpush1.msra.mxu0 0.0
        %1227 = vmatprep.subr.mxu0 0.0
        %1228 = vmatpush1.msra.mxu0 0.0
        %1229 = vmatprep.subr.mxu0 0.0
        %1230 = vmatpush1.msra.mxu0 0.0
        %1231 = vmatprep.subr.mxu0 0.0
        %1232 = vmatpush1.msra.mxu0 0.0
        %1233 = vmatprep.subr.mxu0 0.0
        %1234 = vmatpush1.msra.mxu0 0.0
        %1235 = vmatprep.subr.mxu0 0.0
        %1236 = vmatpush1.msra.mxu0 0.0
        %1237 = vmatprep.subr.mxu0 0.0
        %1238 = vmatpush1.msra.mxu0 0.0
        %1239 = vmatprep.subr.mxu0 0.0
        %1240 = vmatpush1.msra.mxu0 0.0
        %1241 = vmatprep.subr.mxu0 0.0
        %1242 = vmatpush1.msra.mxu0 0.0
        %1243 = vmatprep.subr.mxu0 0.0
        %1244 = vmatpush1.msra.mxu0 0.0
        %1245 = vmatprep.subr.mxu0 0.0
        %1246 = vmatpush1.msra.mxu0 0.0
        %1247 = vmatprep.subr.mxu0 0.0
        %1248 = vmatpush1.msra.mxu0 0.0
        %1249 = vmatprep.subr.mxu0 0.0
        %1250 = vmatpush1.msra.mxu0 0.0
        %1251 = vmatprep.subr.mxu0 0.0
        %1252 = vmatpush1.msra.mxu0 0.0
        %1253 = vmatprep.subr.mxu0 0.0
        %1254 = vmatpush1.msra.mxu0 0.0
        %1255 = vmatprep.subr.mxu0 0.0
        %1256 = vmatpush1.msra.mxu0 0.0
        %1257 = vmatprep.subr.mxu0 0.0
        %1258 = vmatpush1.msra.mxu0 0.0
        %1259 = vmatprep.subr.mxu0 0.0
        %1260 = vmatpush1.msra.mxu0 0.0
        %1261 = vmatprep.subr.mxu0 0.0
        %1262 = vmatpush1.msra.mxu0 0.0
        %1263 = vmatprep.subr.mxu0 0.0
        %1264 = vmatpush1.msra.mxu0 0.0
        %1265 = vmatprep.mubr.f32.mxu0 0.0
        %1266 = vmatmul.mubr.f32.gmra.mrb[0].mxu0 %v1193
        %v1267 = vpop.f32.mrb[0].mxu0
        %v1268 = vadd.f32 %v1190, %v1267
        %v1269 = vpop.f32.mrb[0].mxu0
        %v1270 = vadd.f32 %v1190, %v1269
        %1271 = vmatprep.mubr.f32.mxu0 0.0
        %1272 = vmatmul.mubr.f32.gmra.mrb[0].mxu0 %v1196
        %v1273 = vpop.f32.mrb[0].mxu0
        %v1274 = vadd.f32 %v1190, %v1273
        %v1275 = vpop.f32.mrb[0].mxu0
        %v1276 = vadd.f32 %v1190, %v1275
        %1277 = vmatprep.mubr.f32.mxu0 0.0
        %1278 = vmatmul.mubr.f32.gmra.mrb[0].mxu0 %v1199
        %v1279 = vpop.f32.mrb[0].mxu0
        %v1280 = vadd.f32 %v1190, %v1279
        %v1281 = vpop.f32.mrb[0].mxu0
        %v1282 = vadd.f32 %v1190, %v1281
        %1283 = vdwg.mxu0
        %1284 = vmatprep.subr.mxu0 %v1178
        %1285 = vmatpush1.msra.mxu0 %v1177
        %1286 = vmatprep.subr.mxu0 0.0
        %1287 = vmatpush1.msra.mxu0 0.0
        %1288 = vmatprep.subr.mxu0 0.0
        %1289 = vmatpush1.msra.mxu0 0.0
        %1290 = vmatprep.subr.mxu0 0.0
        %1291 = vmatpush1.msra.mxu0 0.0
        %1292 = vmatprep.subr.mxu0 0.0
        %1293 = vmatpush1.msra.mxu0 0.0
        %1294 = vmatprep.subr.mxu0 0.0
        %1295 = vmatpush1.msra.mxu0 0.0
        %1296 = vmatprep.subr.mxu0 0.0
        %1297 = vmatpush1.msra.mxu0 0.0
        %1298 = vmatprep.subr.mxu0 0.0
        %1299 = vmatpush1.msra.mxu0 0.0
        %1300 = vmatprep.subr.mxu0 0.0
        %1301 = vmatpush1.msra.mxu0 0.0
        %1302 = vmatprep.subr.mxu0 0.0
        %1303 = vmatpush1.msra.mxu0 0.0
        %1304 = vmatprep.subr.mxu0 0.0
        %1305 = vmatpush1.msra.mxu0 0.0
        %1306 = vmatprep.subr.mxu0 0.0
        %1307 = vmatpush1.msra.mxu0 0.0
        %1308 = vmatprep.subr.mxu0 0.0
        %1309 = vmatpush1.msra.mxu0 0.0
        %1310 = vmatprep.subr.mxu0 0.0
        %1311 = vmatpush1.msra.mxu0 0.0
        %1312 = vmatprep.subr.mxu0 0.0
        %1313 = vmatpush1.msra.mxu0 0.0
        %1314 = vmatprep.subr.mxu0 0.0
        %1315 = vmatpush1.msra.mxu0 0.0
        %1316 = vmatprep.subr.mxu0 0.0
        %1317 = vmatpush1.msra.mxu0 0.0
        %1318 = vmatprep.subr.mxu0 0.0
        %1319 = vmatpush1.msra.mxu0 0.0
        %1320 = vmatprep.subr.mxu0 0.0
        %1321 = vmatpush1.msra.mxu0 0.0
        %1322 = vmatprep.subr.mxu0 0.0
        %1323 = vmatpush1.msra.mxu0 0.0
        %1324 = vmatprep.subr.mxu0 0.0
        %1325 = vmatpush1.msra.mxu0 0.0
        %1326 = vmatprep.subr.mxu0 0.0
        %1327 = vmatpush1.msra.mxu0 0.0
        %1328 = vmatprep.subr.mxu0 0.0
        %1329 = vmatpush1.msra.mxu0 0.0
        %1330 = vmatprep.subr.mxu0 0.0
        %1331 = vmatpush1.msra.mxu0 0.0
        %1332 = vmatprep.subr.mxu0 0.0
        %1333 = vmatpush1.msra.mxu0 0.0
        %1334 = vmatprep.subr.mxu0 0.0
        %1335 = vmatpush1.msra.mxu0 0.0
        %1336 = vmatprep.subr.mxu0 0.0
        %1337 = vmatpush1.msra.mxu0 0.0
        %1338 = vmatprep.subr.mxu0 0.0
        %1339 = vmatpush1.msra.mxu0 0.0
        %1340 = vmatprep.subr.mxu0 0.0
        %1341 = vmatpush1.msra.mxu0 0.0
        %1342 = vmatprep.subr.mxu0 0.0
        %1343 = vmatpush1.msra.mxu0 0.0
        %1344 = vmatprep.subr.mxu0 0.0
        %1345 = vmatpush1.msra.mxu0 0.0
        %1346 = vmatprep.subr.mxu0 0.0
        %1347 = vmatpush1.msra.mxu0 0.0
        %1348 = vmatprep.mubr.f32.mxu0 0.0
        %1349 = vmatmul.mubr.f32.gmra.mrb[0].mxu0 %v1193
        %v1350 = vpop.f32.mrb[0].mxu0
        %v1351 = vadd.f32 %v1190, %v1350
        %v1352 = vpop.f32.mrb[0].mxu0
        %v1353 = vadd.f32 %v1190, %v1352
        %1354 = vmatprep.mubr.f32.mxu0 0.0
        %1355 = vmatmul.mubr.f32.gmra.mrb[0].mxu0 %v1196
        %v1356 = vpop.f32.mrb[0].mxu0
        %v1357 = vadd.f32 %v1190, %v1356
        %v1358 = vpop.f32.mrb[0].mxu0
        %v1359 = vadd.f32 %v1190, %v1358
        %1360 = vmatprep.mubr.f32.mxu0 0.0
        %1361 = vmatmul.mubr.f32.gmra.mrb[0].mxu0 %v1199
        %v1362 = vpop.f32.mrb[0].mxu0
        %v1363 = vadd.f32 %v1190, %v1362
        %v1364 = vpop.f32.mrb[0].mxu0
        %v1365 = vadd.f32 %v1190, %v1364
        %1366 = vdwg.mxu0
        %v1367 = vmax.f32 %v1268, 0.0
        %v1368 = vmax.f32 %v1270, 0.0
        %v1369 = vmax.f32 %v1351, 0.0
        %v1370 = vmax.f32 %v1353, 0.0
        %v1371 = vmax.f32 %v1274, 0.0
        %v1372 = vmax.f32 %v1276, 0.0
        %v1373 = vmax.f32 %v1357, 0.0
        %v1374 = vmax.f32 %v1359, 0.0
        %v1375 = vmax.f32 %v1280, 0.0
        %v1376 = vmax.f32 %v1282, 0.0
        %v1377 = vmax.f32 %v1363, 0.0
        %v1378 = vmax.f32 %v1365, 0.0
        %v1379 = vld [vmem:[%s10] sm:$0x1]
        %v1380 = vld [vmem:[#allocation3] sm:$0x1]
        %1382 = vset.pattern.permute.xlu0 0
        %1383 = vperm.xlu0 %1382, %v1380
        %v1384 = vpop.permute.xlu0 %1383
        %v1386 = vlaneseq
        %v1387 = vshrl.u32 %v1386, 7
        %v1388 = vsub.s32 0, %v1387
        %v1389 = vrot.slane %v1384, %v1388
        %v1391 = vsel %vm966, %v1379, 0
        %1393 = vmatprep.subr.mxu0 %v1368
        %1394 = vmatpush1.msra.mxu0 %v1367
        %1395 = vmatprep.subr.mxu0 %v1372
        %1396 = vmatpush1.msra.mxu0 %v1371
        %1397 = vmatprep.subr.mxu0 %v1376
        %1398 = vmatpush1.msra.mxu0 %v1375
        %1399 = vmatprep.subr.mxu0 0.0
        %1400 = vmatpush1.msra.mxu0 0.0
        %1401 = vmatprep.subr.mxu0 0.0
        %1402 = vmatpush1.msra.mxu0 0.0
        %1403 = vmatprep.subr.mxu0 0.0
        %1404 = vmatpush1.msra.mxu0 0.0
        %1405 = vmatprep.subr.mxu0 0.0
        %1406 = vmatpush1.msra.mxu0 0.0
        %1407 = vmatprep.subr.mxu0 0.0
        %1408 = vmatpush1.msra.mxu0 0.0
        %1409 = vmatprep.subr.mxu0 0.0
        %1410 = vmatpush1.msra.mxu0 0.0
        %1411 = vmatprep.subr.mxu0 0.0
        %1412 = vmatpush1.msra.mxu0 0.0
        %1413 = vmatprep.subr.mxu0 0.0
        %1414 = vmatpush1.msra.mxu0 0.0
        %1415 = vmatprep.subr.mxu0 0.0
        %1416 = vmatpush1.msra.mxu0 0.0
        %1417 = vmatprep.subr.mxu0 0.0
        %1418 = vmatpush1.msra.mxu0 0.0
        %1419 = vmatprep.subr.mxu0 0.0
        %1420 = vmatpush1.msra.mxu0 0.0
        %1421 = vmatprep.subr.mxu0 0.0
        %1422 = vmatpush1.msra.mxu0 0.0
        %1423 = vmatprep.subr.mxu0 0.0
        %1424 = vmatpush1.msra.mxu0 0.0
        %1425 = vmatprep.subr.mxu0 0.0
        %1426 = vmatpush1.msra.mxu0 0.0
        %1427 = vmatprep.subr.mxu0 0.0
        %1428 = vmatpush1.msra.mxu0 0.0
        %1429 = vmatprep.subr.mxu0 0.0
        %1430 = vmatpush1.msra.mxu0 0.0
        %1431 = vmatprep.subr.mxu0 0.0
        %1432 = vmatpush1.msra.mxu0 0.0
        %1433 = vmatprep.subr.mxu0 0.0
        %1434 = vmatpush1.msra.mxu0 0.0
        %1435 = vmatprep.subr.mxu0 0.0
        %1436 = vmatpush1.msra.mxu0 0.0
        %1437 = vmatprep.subr.mxu0 0.0
        %1438 = vmatpush1.msra.mxu0 0.0
        %1439 = vmatprep.subr.mxu0 0.0
        %1440 = vmatpush1.msra.mxu0 0.0
        %1441 = vmatprep.subr.mxu0 0.0
        %1442 = vmatpush1.msra.mxu0 0.0
        %1443 = vmatprep.subr.mxu0 0.0
        %1444 = vmatpush1.msra.mxu0 0.0
        %1445 = vmatprep.subr.mxu0 0.0
        %1446 = vmatpush1.msra.mxu0 0.0
        %1447 = vmatprep.subr.mxu0 0.0
        %1448 = vmatpush1.msra.mxu0 0.0
        %1449 = vmatprep.subr.mxu0 0.0
        %1450 = vmatpush1.msra.mxu0 0.0
        %1451 = vmatprep.subr.mxu0 0.0
        %1452 = vmatpush1.msra.mxu0 0.0
        %1453 = vmatprep.subr.mxu0 0.0
        %1454 = vmatpush1.msra.mxu0 0.0
        %1455 = vmatprep.subr.mxu0 0.0
        %1456 = vmatpush1.msra.mxu0 0.0
        %1457 = vmatprep.mubr.f32.mxu0 0.0
        %1458 = vmatmul.mubr.f32.gmra.mrb[0].mxu0 %v1391
        %v1459 = vpop.f32.mrb[0].mxu0
        %v1460 = vadd.f32 %v1389, %v1459
        %v1461 = vpop.f32.mrb[0].mxu0
        %v1462 = vadd.f32 %v1389, %v1461
        %1463 = vdwg.mxu0
        %1464 = vmatprep.subr.mxu0 %v1370
        %1465 = vmatpush1.msra.mxu0 %v1369
        %1466 = vmatprep.subr.mxu0 %v1374
        %1467 = vmatpush1.msra.mxu0 %v1373
        %1468 = vmatprep.subr.mxu0 %v1378
        %1469 = vmatpush1.msra.mxu0 %v1377
        %1470 = vmatprep.subr.mxu0 0.0
        %1471 = vmatpush1.msra.mxu0 0.0
        %1472 = vmatprep.subr.mxu0 0.0
        %1473 = vmatpush1.msra.mxu0 0.0
        %1474 = vmatprep.subr.mxu0 0.0
        %1475 = vmatpush1.msra.mxu0 0.0
        %1476 = vmatprep.subr.mxu0 0.0
        %1477 = vmatpush1.msra.mxu0 0.0
        %1478 = vmatprep.subr.mxu0 0.0
        %1479 = vmatpush1.msra.mxu0 0.0
        %1480 = vmatprep.subr.mxu0 0.0
        %1481 = vmatpush1.msra.mxu0 0.0
        %1482 = vmatprep.subr.mxu0 0.0
        %1483 = vmatpush1.msra.mxu0 0.0
        %1484 = vmatprep.subr.mxu0 0.0
        %1485 = vmatpush1.msra.mxu0 0.0
        %1486 = vmatprep.subr.mxu0 0.0
        %1487 = vmatpush1.msra.mxu0 0.0
        %1488 = vmatprep.subr.mxu0 0.0
        %1489 = vmatpush1.msra.mxu0 0.0
        %1490 = vmatprep.subr.mxu0 0.0
        %1491 = vmatpush1.msra.mxu0 0.0
        %1492 = vmatprep.subr.mxu0 0.0
        %1493 = vmatpush1.msra.mxu0 0.0
        %1494 = vmatprep.subr.mxu0 0.0
        %1495 = vmatpush1.msra.mxu0 0.0
        %1496 = vmatprep.subr.mxu0 0.0
        %1497 = vmatpush1.msra.mxu0 0.0
        %1498 = vmatprep.subr.mxu0 0.0
        %1499 = vmatpush1.msra.mxu0 0.0
        %1500 = vmatprep.subr.mxu0 0.0
        %1501 = vmatpush1.msra.mxu0 0.0
        %1502 = vmatprep.subr.mxu0 0.0
        %1503 = vmatpush1.msra.mxu0 0.0
        %1504 = vmatprep.subr.mxu0 0.0
        %1505 = vmatpush1.msra.mxu0 0.0
        %1506 = vmatprep.subr.mxu0 0.0
        %1507 = vmatpush1.msra.mxu0 0.0
        %1508 = vmatprep.subr.mxu0 0.0
        %1509 = vmatpush1.msra.mxu0 0.0
        %1510 = vmatprep.subr.mxu0 0.0
        %1511 = vmatpush1.msra.mxu0 0.0
        %1512 = vmatprep.subr.mxu0 0.0
        %1513 = vmatpush1.msra.mxu0 0.0
        %1514 = vmatprep.subr.mxu0 0.0
        %1515 = vmatpush1.msra.mxu0 0.0
        %1516 = vmatprep.subr.mxu0 0.0
        %1517 = vmatpush1.msra.mxu0 0.0
        %1518 = vmatprep.subr.mxu0 0.0
        %1519 = vmatpush1.msra.mxu0 0.0
        %1520 = vmatprep.subr.mxu0 0.0
        %1521 = vmatpush1.msra.mxu0 0.0
        %1522 = vmatprep.subr.mxu0 0.0
        %1523 = vmatpush1.msra.mxu0 0.0
        %1524 = vmatprep.subr.mxu0 0.0
        %1525 = vmatpush1.msra.mxu0 0.0
        %1526 = vmatprep.subr.mxu0 0.0
        %1527 = vmatpush1.msra.mxu0 0.0
        %1528 = vmatprep.mubr.f32.mxu0 0.0
        %1529 = vmatmul.mubr.f32.gmra.mrb[0].mxu0 %v1391
        %v1530 = vpop.f32.mrb[0].mxu0
        %v1531 = vadd.f32 %v1389, %v1530
        %v1532 = vpop.f32.mrb[0].mxu0
        %v1533 = vadd.f32 %v1389, %v1532
        %1534 = vdwg.mxu0
        %v1539 = vcombine.low %v1460, %v1462
        %v1540 = vcombine.low %v1531, %v1533
        %v1542 = vunpack.c.l.s4 1966171168
        %v1543 = vunpack.c.0.s8 %v1542
        %v1544 = vlaneseq
        %v1545 = vshrl.u32 %v1544, 7
        %v1546 = vsub.s32 %v1543, %v1545
        %v1547 = vrot.slane %v1539, %v1546
        %v1549 = vunpack.c.l.s4 1966171168
        %v1550 = vunpack.c.0.s8 %v1549
        %v1551 = vlaneseq
        %v1552 = vshrl.u32 %v1551, 7
        %v1553 = vsub.s32 %v1550, %v1552
        %v1554 = vrot.slane %v1540, %v1553
        %v1555 = vcombine.low %v1547, %v1554
        %v1557 = vunpack.c.l.s4 1966171168
        %v1558 = vunpack.c.0.s8 %v1557
        %v1559 = vlaneseq
        %v1560 = vshrl.u32 %v1559, 7
        %v1561 = vsub.s32 %v1558, %v1560
        %v1562 = vrot.slane %v1555, %v1561
        %v1564 = vlaneseq
        %vm1565 = vcmp.ge.s32.totalorder %v1564, 0
        %vm1566 = vcmp.lt.s32.totalorder %v1564, 512
        %vm1567 = vmand %vm1565, %vm1566
        %1568 = vst.msk [vmem:[%s455] sm:$0xf] %vm1567, %v1562
        %v1569 = vlaneseq
        %v1570 = vand.u32 %v1569, 127
        %v1571 = vadd.s32 %v1570, 128
        %v1572 = vadd.s32 %v1570, 256
        %v1573 = vadd.s32 %v1570, 384
        %s1574 = smul.u32 %s32, 512
        %v1575 = vstv %s1574
        %v1576 = vadd.s32 %v1575, %v1570
        %v1577 = vadd.s32 %v1575, %v1571
        %v1578 = vadd.s32 %v1575, %v1572
        %v1579 = vadd.s32 %v1575, %v1573
        %vm1580 = vcmp.lt.s32.totalorder %v1576, 1000
        %vm1581 = vcmp.lt.s32.totalorder %v1577, 1000
        %vm1582 = vcmp.lt.s32.totalorder %v1578, 1000
        %vm1583 = vcmp.lt.s32.totalorder %v1579, 1000
        %v1584 = vmul.f32 %v1163, %v1163
        %v1585 = vmul.f32 %v1164, %v1164
        %v1586 = vmul.f32 %v1165, %v1165
        %v1587 = vmul.f32 %v1166, %v1166
        %v1588 = vmul.f32 %v1159, %v1159
        %v1589 = vmul.f32 %v1160, %v1160
        %v1590 = vmul.f32 %v1161, %v1161
        %v1591 = vmul.f32 %v1162, %v1162
        %v1592 = vadd.f32 %v1588, %v1584
        %v1593 = vadd.f32 %v1589, %v1585
        %v1594 = vadd.f32 %v1590, %v1586
        %v1595 = vadd.f32 %v1591, %v1587
        %v1596 = vadd.f32 %v1584, 1e-08
        %v1597 = vadd.f32 %v1585, 1e-08
        %v1598 = vadd.f32 %v1586, 1e-08
        %v1599 = vadd.f32 %v1587, 1e-08
        %v1600 = vlog2.pop %v1596
        %v1601 = vmul.f32 %v1600, 0.6931472
        %v1602 = vlog2.pop %v1597
        %v1603 = vmul.f32 %v1602, 0.6931472
        %v1604 = vlog2.pop %v1598
        %v1605 = vmul.f32 %v1604, 0.6931472
        %v1606 = vlog2.pop %v1599
        %v1607 = vmul.f32 %v1606, 0.6931472
        %v1608 = vsub.f32 %v1592, %v1601
        %v1609 = vsub.f32 %v1593, %v1603
        %v1610 = vsub.f32 %v1594, %v1605
        %v1611 = vsub.f32 %v1595, %v1607
        %v1612 = vsub.f32 %v1608, 1.0
        %v1613 = vsub.f32 %v1609, 1.0
        %v1614 = vsub.f32 %v1610, 1.0
        %v1615 = vsub.f32 %v1611, 1.0
        %v1616 = vsel %vm1580, 1, 0
        %v1617 = vsel %vm1581, 1, 0
        %v1618 = vsel %vm1582, 1, 0
        %v1619 = vsel %vm1583, 1, 0
        %vm1620 = vcmp.eq.s32.totalorder %v1616, 1
        %vm1621 = vcmp.eq.s32.totalorder %v1617, 1
        %vm1622 = vcmp.eq.s32.totalorder %v1618, 1
        %vm1623 = vcmp.eq.s32.totalorder %v1619, 1
        %v1624 = vsel %vm1620, %v1612, 0.0
        %v1625 = vsel %vm1621, %v1613, 0.0
        %v1626 = vsel %vm1622, %v1614, 0.0
        %v1627 = vsel %vm1623, %v1615, 0.0
        %v1628 = vadd.f32 %v1624, %v1625
        %v1629 = vadd.f32 %v1628, %v1626
        %v1630 = vadd.f32 %v1629, %v1627
        %1631 = vadd.xlane.f32.xlu0 %v1630
        %v1632 = vpop.xlane.xlu0 %1631
        %v1633 = vrot.slane %v1632, 4
        %v1634 = vadd.f32 %v1632, %v1633
        %v1635 = vrot.slane %v1634, 2
        %v1636 = vadd.f32 %v1634, %v1635
        %v1637 = vrot.slane %v1636, 1
        %v1638 = vadd.f32 %v1636, %v1637
        %v1639 = vmul.f32 %v1638, 0.0013020834
        %vm1640 = vcmask 0
        %1641 = vst.msk [vmem:[%s476] sm:$0x1] %vm1640, %v1639
        %s1642 = sand.u32 %s302, 1
        %s1643 = scalar_lea.sflag [#allocation5], %s1642
        %s1644 = sand.u32 %s302, 1
        %s1645 = smul.addr %s1644, 4
        %s1646 = scalar_lea.vmem [#allocation4], %s1645
        %p1647 = scmp.lt.s32.totalorder %s32, 1
        %s1648 = scalar_select %p1647, %s32, 1
        %s1649 = scalar_lea.vmem %s13, %s1648
        // Predicated region
        $region69: #{tpu_custom_call.1} parent=67 // pred_check
          %p1650 = pneg %p312
        $region70: #{tpu_custom_call.1} parent=67 // pred_check_branch
          %1652 = sbr.rel (%p1650) target = $region72
        $region71: #{tpu_custom_call.1} parent=67 // pred_region
          %s1653 = smul.u32 4, %s32
          %s1655 = ssub.s32 64, 64
          %1656 = vsyncadd %s1643, %s1655
          %s1657 = smul.addr %s1653, 16
          %s1658 = scalar_lea.hbm %s12, %s1657
          %s1660 = sshll.u32 %s1646, 4
          %s1661 = int_to_ptr.vmem [resolvable:$true] %s1660
          %1663 = dma.vmem_to_hbm [thread:$0]  %s1661, 64, %s1658, %s1643
        $region72: #{tpu_custom_call.1} parent=67 // pred_fallthru
          _
        // Predicated region
        $region73: #{tpu_custom_call.1} parent=67 // pred_check
          %p1664 = pneg %p338
        $region74: #{tpu_custom_call.1} parent=67 // pred_check_branch
          %1666 = sbr.rel (%p1664) target = $region76
        $region75: #{tpu_custom_call.1} parent=67 // pred_region
          _
        $region76: #{tpu_custom_call.1} parent=67 // pred_fallthru
          _
      $region68: #{tpu_custom_call.1} parent=5 // pred_fallthru
        _
      %p1667 = scmp.le.s32.totalorder 2, %s27
      // Predicated region
      $region77: #{tpu_custom_call.1} parent=5 // pred_check
        %p1668 = pneg %p1667
      $region78: #{tpu_custom_call.1} parent=5 // pred_check_branch
        %1670 = sbr.rel (%p1668) target = $region80
      $region79: #{tpu_custom_call.1} parent=5 // pred_region
        %s1671 = ssub.s32 %s27, 2
        // Predicated region
        $region81: #{tpu_custom_call.1} parent=79 // pred_check
          %p1672 = pneg %p318
        $region82: #{tpu_custom_call.1} parent=79 // pred_check_branch
          %1674 = sbr.rel (%p1672) target = $region84
        $region83: #{tpu_custom_call.1} parent=79 // pred_region
          %s1675 = sand.u32 %s303, 1
          %s1676 = scalar_lea.sflag [#allocation5], %s1675
          %s1677 = sand.u32 %s303, 1
          %s1678 = smul.addr %s1677, 4
          %s1679 = scalar_lea.vmem [#allocation4], %s1678
          %1680 = dma.done %s1676, 64
        $region84: #{tpu_custom_call.1} parent=79 // pred_fallthru
          _
        // Predicated region
        $region85: #{tpu_custom_call.1} parent=79 // pred_check
          %p1681 = pneg %p344
        $region86: #{tpu_custom_call.1} parent=79 // pred_check_branch
          %1683 = sbr.rel (%p1681) target = $region88
        $region87: #{tpu_custom_call.1} parent=79 // pred_region
          %p1684 = scmp.lt.s32.totalorder %s33, 1
          %s1685 = scalar_select %p1684, %s33, 1
          %s1686 = scalar_lea.vmem %s13, %s1685
        $region88: #{tpu_custom_call.1} parent=79 // pred_fallthru
          _
      $region80: #{tpu_custom_call.1} parent=5 // pred_fallthru
        _
    $region6: #{tpu_custom_call.1} parent=1 // loop_footer
      %s31 = sadd.s32 1, %s27
    $region7: #{tpu_custom_call.1} parent=1 // loop_footer_branch
      %26 = sbr.rel target = $region3
    $region8: #{tpu_custom_call.1} parent=1 // loop_exit
      _
    %1687 = vsyncpa [#allocation5], 1
    %s1688 = scalar_lea.sflag [#allocation5], 1
    %1689 = vsyncpa %s1688, 1

</llo_original>
